<compile_context>
chip_gen: v6e
topology: v6e:2x2x1
jax: 0.10.0
libtpu: 0.0.40
codegen_flags: <defaults>
</compile_context>

<pallas_src>
import functools

import jax
import jax.numpy as jnp
import numpy as np
from jax.experimental import pallas as pl
from jax.experimental.pallas import tpu as pltpu

# ----- small synthetic configuration (matches module constraints) -----------
B, T, N = 2, 2, 8
D = 32                    # lifting_dim
HEADS = 4                 # num_heads
DH = D // HEADS           # d_head = 8 (even, as required)
F = 3                     # num_hetero_feats
S = T * N                 # sequence length = 16
SS = S * S                # number of (query, key) pairs = 256
HS = HEADS * S            # head-stacked row count = 64
FS = F * S                # feature-stacked key count = 48
HID = 16                  # spherical harmonics MLP hidden_dim
ROPE_BASE = 1000.0
EPS = 1e-6
C0 = 0.28209479177387814  # Y_0^0 = 1 / (2*sqrt(pi))
C1 = 0.4886025119029199   # sqrt(3/(4*pi)), l=1 components ordered (y, z, x)
PREC = jax.lax.Precision.HIGHEST


# =============================================================================
# Precomputed selector / indicator constants (wrapper-side, numpy)
# =============================================================================
@functools.lru_cache(maxsize=None)
def _selector_constants():
    p = np.arange(SS)
    qi = p // S          # query index of pair p
    kj = p % S           # key   index of pair p
    # coords[3,S] @ diff_sel -> rel[3,SS] = coords[:, i] - coords[:, j]
    diff_sel = np.zeros((S, SS), np.float32)
    diff_sel[qi, p] += 1.0
    diff_sel[kj, p] -= 1.0
    # row (h*S + i) keeps only pairs whose query index equals i
    qsel_big = np.tile((qi[None, :] == np.arange(S)[:, None]).astype(np.float32),
                       (HEADS, 1))                                      # [HS, SS]
    # pair p -> key column j, tiled over the F feature blocks
    unflat_f = np.tile((kj[:, None] == np.arange(S)[None, :]).astype(np.float32),
                       (1, F))                                          # [SS, FS]
    # per-feature-block sum / broadcast indicators for the softmax denominator
    ind = (np.arange(FS)[:, None] // S
           == np.arange(F)[None, :]).astype(np.float32)                 # [FS, F]
    ind_t = np.ascontiguousarray(ind.T)                                 # [F, FS]
    # keep head h's own DH-wide column band of probs @ V
    out_mask = (np.arange(HS)[:, None] // S
                == np.arange(D)[None, :] // DH).astype(np.float32)      # [HS, D]
    # collapse the per-head sublane row-blocks back to [S, D]
    rsum = np.tile(np.eye(S, dtype=np.float32), (1, HEADS))             # [S, HS]
    return diff_sel, qsel_big, unflat_f, ind, ind_t, out_mask, rsum


def _num_tensorcores_per_chip():
    """2-TC (megacore) parts get a 'parallel' per-batch grid; single-TC parts a
    single collapsed grid step.  Defaults to 1 (correct everywhere)."""
    try:
        kind = jax.devices()[0].device_kind.lower()
    except Exception:
        return 1
    if 'lite' in kind or 'v5e' in kind or 'v6' in kind:
        return 1
    if 'v7' in kind or '7x' in kind or 'v4' in kind or 'v5p' in kind:
        return 2
    return 1


# =============================================================================
# Fused kernel: SH bias + heterogeneous cross attention + output projection
# =============================================================================
def _qhca_kernel(coords_ref, qbd_ref, kt_ref, v_ref,
                 dsel_ref, qsel_ref, unflat_ref, ind_ref, indt_ref,
                 omask_ref, rsum_ref,
                 w1_ref, b1_ref, w2_ref, b2_ref, w3_ref, b3_ref,
                 wo_ref, bo_ref, out_ref):
    f32 = jnp.float32
    nb = out_ref.shape[0]   # static: 1 (per-batch grid) or B (collapsed grid)

    def one_batch(b):
        # ---- spherical-harmonics bias MLP, lane-dense over the S*S pairs ----
        c_t = coords_ref[b]                                              # [3, S]
        rel = jnp.dot(c_t, dsel_ref[...], preferred_element_type=f32)    # [3, SS]
        r2 = rel[0:1] * rel[0:1] + rel[1:2] * rel[1:2] + rel[2:3] * rel[2:3]
        unit = rel / (jnp.sqrt(r2) + EPS)
        # e3nn spherical_harmonics(normalize=True) re-normalizes its input
        n2 = jnp.sqrt(unit[0:1] * unit[0:1] + unit[1:2] * unit[1:2]
                      + unit[2:3] * unit[2:3])
        unit = unit / jnp.maximum(n2, 1e-12)                             # [3, SS]
        # SH constants folded into layer-1 weights/bias in the wrapper.
        h = jax.nn.silu(jnp.dot(w1_ref[...], unit, preferred_element_type=f32)
                        + b1_ref[...])                                   # [HID, SS]
        h = jax.nn.silu(jnp.dot(w2_ref[...], h, preferred_element_type=f32)
                        + b2_ref[...])                                   # [HID, SS]
        # (MLP dropout p=0.1 is identity in eval mode.)
        # Last MLP layer for ALL heads at once (w3 replicated per query row in
        # the wrapper); mask keeps the pairs whose query index matches the row,
        # then ONE selector matmul un-flattens pairs to the [F*S] key lanes.
        mrows = (jnp.dot(w3_ref[...], h, preferred_element_type=f32)
                 * qsel_ref[...])                                        # [HS, SS]
        bias = (jnp.dot(mrows, unflat_ref[...], preferred_element_type=f32)
                + b3_ref[...])                                           # [HS, FS]

        # ---- heterogeneous cross attention (heads stacked on sublanes) ------
        # q_bd is block-diagonal over heads (1/attention_denom folded in), so a
        # single [HS,D]@[D,FS] matmul yields every head x feature score block.
        scores = jnp.dot(qbd_ref[b], kt_ref[b],
                         preferred_element_type=f32) + bias              # [HS, FS]
        mx = jnp.max(scores, axis=-1, keepdims=True)   # one row-max: a valid
        e = jnp.exp(scores - mx)                       # stabilizer for every block
        bsum = jnp.dot(e, ind_ref[...], preferred_element_type=f32)      # [HS, F]
        rinv = pl.reciprocal(bsum, approx=True)                          # EUP slot
        probs = e * jnp.dot(rinv, indt_ref[...], preferred_element_type=f32)
        # (attention dropout p=0.2 is identity in eval mode.)
        # One probs @ V for all heads/features (gates folded into V); keep each
        # head's own column band, then collapse the head row-blocks to [S, D].
        obd = (jnp.dot(probs, v_ref[b], preferred_element_type=f32)
               * omask_ref[...])                                         # [HS, D]
        merged = jnp.dot(rsum_ref[...], obd, preferred_element_type=f32) # [S, D]
        out_ref[b] = (jnp.dot(merged, wo_ref[...], preferred_element_type=f32)
                      + bo_ref[...])                                     # [S, D]

    if nb == 1:
        one_batch(0)              # per-batch grid step (2-TC parts)
    else:
        @pl.loop(0, nb)           # collapsed grid: in-kernel batch loop (1-TC)
        def _(b):
            one_batch(b)


def qhca_pallas(coords_t, q_bd, kall_t, vall, sh_params, wo, bo):
    """coords_t:[B,3,S]  q_bd:[B,HS,D]  kall_t:[B,D,FS]  vall:[B,FS,D] -> [B,S,D]."""
    w1p, b1p, w2t, b2t, w3big, b3big = sh_params
    consts = tuple(jnp.asarray(c) for c in _selector_constants())

    if _num_tensorcores_per_chip() >= 2 and B > 1:
        grid, bb, sem = (B,), 1, ("parallel",)        # one batch per TensorCore
        bmap = lambda b: (b, 0, 0)
    else:
        grid, bb, sem = (1,), B, ("arbitrary",)       # one step, in-kernel loop
        bmap = lambda b: (0, 0, 0)
    cmap = lambda b: (0, 0)

    in_specs = [
        pl.BlockSpec((bb, 3, S), bmap),               # coords_t
        pl.BlockSpec((bb, HS, D), bmap),              # q_bd (block-diag heads)
        pl.BlockSpec((bb, D, FS), bmap),              # K^T (all heads/features)
        pl.BlockSpec((bb, FS, D), bmap),              # V   (gated, merged-head)
        pl.BlockSpec((S, SS), cmap),                  # diff_sel
        pl.BlockSpec((HS, SS), cmap),                 # qsel_big
        pl.BlockSpec((SS, FS), cmap),                 # unflat_f
        pl.BlockSpec((FS, F), cmap),                  # ind
        pl.BlockSpec((F, FS), cmap),                  # ind_t
        pl.BlockSpec((HS, D), cmap),                  # out_mask
        pl.BlockSpec((S, HS), cmap),                  # rsum
        pl.BlockSpec((HID, 3), cmap),                 # w1p
        pl.BlockSpec((HID, 1), cmap),                 # b1p
        pl.BlockSpec((HID, HID), cmap),               # w2t
        pl.BlockSpec((HID, 1), cmap),                 # b2t
        pl.BlockSpec((HS, HID), cmap),                # w3big
        pl.BlockSpec((HS, 1), cmap),                  # b3big
        pl.BlockSpec((D, D), cmap),                   # wo
        pl.BlockSpec((1, D), cmap),                   # bo
    ]
    return pl.pallas_call(
        _qhca_kernel,
        out_shape=jax.ShapeDtypeStruct((B, S, D), jnp.float32),
        grid=grid,
        in_specs=in_specs,
        out_specs=pl.BlockSpec((bb, S, D), bmap),
        compiler_params=pltpu.CompilerParams(dimension_semantics=sem),
    )(coords_t, q_bd, kall_t, vall, *consts,
      w1p, b1p, w2t, b2t, w3big, b3big, wo, bo[None, :])


# =============================================================================
# Plain-JAX glue: parameters, projections, RoPE
# =============================================================================
def init_params(key):
    ks = jax.random.split(key, 8)

    def lin(k, i, o):
        kw, kb = jax.random.split(k)
        return (0.1 * jax.random.normal(kw, (i, o), jnp.float32),
                0.1 * jax.random.normal(kb, (o,), jnp.float32))

    p = {}
    p['wq'], p['bq'] = lin(ks[0], D, D)
    p['wk'], p['bk'] = lin(ks[1], D, D)
    p['wv'], p['bv'] = lin(ks[2], D, D)
    p['wo'], p['bo'] = lin(ks[3], D, D)
    p['feature_weights'] = 0.1 * jax.random.normal(ks[4], (F,), jnp.float32)
    p['attention_denom'] = jnp.full((HEADS,), float(DH), jnp.float32)  # d_head, NOT sqrt
    p['rope_offset'] = jnp.zeros((HEADS,), jnp.float32)
    p['rope_freqs'] = 1.0 / ROPE_BASE ** (
        2.0 * jnp.arange(DH // 2, dtype=jnp.float32) / DH)
    p['sh_w1'], p['sh_b1'] = lin(ks[5], 4, HID)      # 4 = sum(2l+1, l=0..1)
    p['sh_w2'], p['sh_b2'] = lin(ks[6], HID, HID)
    p['sh_w3'], p['sh_b3'] = lin(ks[7], HID, HEADS)
    return p


def apply_rope(x, offset, freqs):
    """Time-only RoPE with per-head offsets, mask=None path.  x: [B,H,S,DH]."""
    positions = jnp.repeat(jnp.arange(T, dtype=jnp.float32), N)        # [S]
    shifted = positions[None, :] + offset[:, None]                     # [H, S]
    angle = shifted[:, :, None] * freqs[None, None, :]                 # [H, S, DH/2]
    cos_t = jnp.cos(angle)[None]
    sin_t = jnp.sin(angle)[None]
    t1 = x[..., 0::2]
    t2 = x[..., 1::2]
    r0 = t1 * cos_t - t2 * sin_t
    r1 = t1 * sin_t + t2 * cos_t
    return jnp.stack([r0, r1], axis=-1).reshape(x.shape)


def _proj_heads(x, w, b):
    y = jnp.einsum('bsd,de->bse', x, w, precision=PREC) + b
    return jnp.transpose(y.reshape(B, S, HEADS, DH), (0, 2, 1, 3))     # [B,H,S,DH]


def forward(p, x_0, v_0, concatenated_features, q_data, *, use_pallas=True):
    q_flat = q_data.reshape(B, S, D)
    feats = [x_0.reshape(B, S, D), v_0.reshape(B, S, D),
             concatenated_features.reshape(B, S, D)]

    q = apply_rope(_proj_heads(q_flat, p['wq'], p['bq']),
                   p['rope_offset'], p['rope_freqs'])
    ks, vs = [], []
    for hf in feats:
        ks.append(apply_rope(_proj_heads(hf, p['wk'], p['bk']),
                             p['rope_offset'], p['rope_freqs']))
        vs.append(_proj_heads(hf, p['wv'], p['bv']))
    k_all = jnp.stack(ks, axis=1)     # [B, F, H, S, DH]
    v_all = jnp.stack(vs, axis=1)

    coords = x_0[..., :3].reshape(B, S, 3)
    gates = jax.nn.softmax(p['feature_weights'])

    if use_pallas:
        # Fold 1/attention_denom into Q, then block-diagonalise Q over heads so
        # the kernel's score matmul covers every head in one MXU push.
        q_scaled = q / p['attention_denom'][None, :, None, None]        # [B,H,S,DH]
        q_bd = jnp.einsum('bhsd,hg->bhsgd', q_scaled,
                          jnp.eye(HEADS, dtype=jnp.float32)).reshape(B, HS, D)
        # K pre-transposed to [B, D, F*S] (no in-kernel transpose); V gated and
        # laid out [B, F*S, D] so probs @ V lands directly in merged-head order.
        kall_t = jnp.transpose(k_all, (0, 2, 4, 1, 3)).reshape(B, D, FS)
        v_gated = v_all * gates[None, :, None, None, None]
        vall = jnp.transpose(v_gated, (0, 1, 3, 2, 4)).reshape(B, FS, D)
        coords_t = jnp.transpose(coords, (0, 2, 1))                     # [B, 3, S]
        # SH MLP weights folded for the lane-dense in-kernel layout:
        #   layer 1 absorbs the SH constants (C1 scale; C0 row into the bias),
        #   layer 3 is replicated per query row so the whole-head bias needs
        #   only one masked matmul + one unflatten matmul inside the kernel.
        w1_xyz = jnp.stack([p['sh_w1'][3], p['sh_w1'][1], p['sh_w1'][2]], axis=0)
        w1p = (C1 * w1_xyz).T                                           # [HID, 3]
        b1p = (p['sh_b1'] + C0 * p['sh_w1'][0, :])[:, None]             # [HID, 1]
        w2t = p['sh_w2'].T                                              # [HID, HID]
        b2t = p['sh_b2'][:, None]
        w3big = jnp.repeat(p['sh_w3'].T, S, axis=0)                     # [HS, HID]
        b3big = jnp.repeat(p['sh_b3'], S)[:, None]                      # [HS, 1]
        out = qhca_pallas(coords_t, q_bd, kall_t, vall,
                          (w1p, b1p, w2t, b2t, w3big, b3big), p['wo'], p['bo'])
    else:
        bias = _sh_bias_ref(coords, p)
        out = _attn_ref(q, k_all, v_all, bias, p, gates)
    return out.reshape(B, T, N, D)


# ----- pure-JAX references of the kernel math (for verification) ------------
def _sh_bias_ref(coords, p):
    rel = coords[:, :, None, :] - coords[:, None, :, :]
    norm = jnp.sqrt(jnp.sum(rel * rel, axis=-1, keepdims=True))
    unit = rel / (norm + EPS)
    n2 = jnp.sqrt(jnp.sum(unit * unit, axis=-1, keepdims=True))
    unit = unit / jnp.maximum(n2, 1e-12)
    sh = jnp.concatenate(
        [jnp.full(unit.shape[:-1] + (1,), C0, jnp.float32),
         C1 * unit[..., 1:2], C1 * unit[..., 2:3], C1 * unit[..., 0:1]], axis=-1)
    h = jax.nn.silu(jnp.einsum('bijc,ch->bijh', sh, p['sh_w1'], precision=PREC)
                    + p['sh_b1'])
    h = jax.nn.silu(jnp.einsum('bijc,ch->bijh', h, p['sh_w2'], precision=PREC)
                    + p['sh_b2'])
    bias = jnp.einsum('bijc,ch->bijh', h, p['sh_w3'], precision=PREC) + p['sh_b3']
    return jnp.transpose(bias, (0, 3, 1, 2))


def _attn_ref(q, k_all, v_all, bias, p, gates):
    acc = jnp.zeros_like(q)
    for f in range(F):
        scores = jnp.einsum('bhqd,bhkd->bhqk', q, k_all[:, f], precision=PREC)
        scores = scores / p['attention_denom'][None, :, None, None] + bias
        w = jax.nn.softmax(scores, axis=-1)
        acc = acc + gates[f] * jnp.einsum('bhqk,bhkd->bhqd', w, v_all[:, f],
                                          precision=PREC)
    merged = jnp.transpose(acc, (0, 2, 1, 3)).reshape(B, S, D)
    return jnp.einsum('bsd,de->bse', merged, p['wo'], precision=PREC) + p['bo']


# =============================================================================
if __name__ == "__main__":
    key = jax.random.PRNGKey(0)
    kx, kv, kc, kq, kp = jax.random.split(key, 5)
    x_0 = jax.random.normal(kx, (B, T, N, D), jnp.float32)
    v_0 = jax.random.normal(kv, (B, T, N, D), jnp.float32)
    concatenated_features = jax.random.normal(kc, (B, T, N, D), jnp.float32)
    q_data = jax.random.normal(kq, (B, T, N, D), jnp.float32)
    params = init_params(kp)

    out = forward(params, x_0, v_0, concatenated_features, q_data, use_pallas=True)
    out = jax.block_until_ready(out)
    assert out.shape == (B, T, N, D), out.shape

    ref = jax.block_until_ready(
        forward(params, x_0, v_0, concatenated_features, q_data, use_pallas=False))
    # tolerance accommodates the EUP approx reciprocal in the softmax
    np.testing.assert_allclose(np.asarray(out), np.asarray(ref),
                               rtol=1e-2, atol=2e-3)
    print("KERNEL_OK")
</pallas_src>

<mosaic_0001>
module attributes {stable_mosaic.version = 11 : i64} {
  func.func @_qhca_kernel(%arg0: i32, %arg1: memref<2x3x16xf32, #tpu.memory_space<vmem>>, %arg2: memref<2x64x32xf32, #tpu.memory_space<vmem>>, %arg3: memref<2x32x48xf32, #tpu.memory_space<vmem>>, %arg4: memref<2x48x32xf32, #tpu.memory_space<vmem>>, %arg5: memref<16x256xf32, #tpu.memory_space<vmem>>, %arg6: memref<64x256xf32, #tpu.memory_space<vmem>>, %arg7: memref<256x48xf32, #tpu.memory_space<vmem>>, %arg8: memref<48x3xf32, #tpu.memory_space<vmem>>, %arg9: memref<3x48xf32, #tpu.memory_space<vmem>>, %arg10: memref<64x32xf32, #tpu.memory_space<vmem>>, %arg11: memref<16x64xf32, #tpu.memory_space<vmem>>, %arg12: memref<16x3xf32, #tpu.memory_space<vmem>>, %arg13: memref<16x1xf32, #tpu.memory_space<vmem>>, %arg14: memref<16x16xf32, #tpu.memory_space<vmem>>, %arg15: memref<16x1xf32, #tpu.memory_space<vmem>>, %arg16: memref<64x16xf32, #tpu.memory_space<vmem>>, %arg17: memref<64x1xf32, #tpu.memory_space<vmem>>, %arg18: memref<32x32xf32, #tpu.memory_space<vmem>>, %arg19: memref<1x32xf32, #tpu.memory_space<vmem>>, %arg20: memref<2x16x32xf32, #tpu.memory_space<vmem>>) attributes {dimension_semantics = [#tpu.dimension_semantics<arbitrary>], iteration_bounds = array<i64: 1>, scalar_prefetch = 0 : i64, scratch_operands = 0 : i64, tpu.core_type = #tpu.core_type<tc>, window_params = [{pipeline_mode = #tpu.pipeline_mode<synchronous>, transform_indices = @transform_0, window_bounds = array<i64: 2, 3, 16>}, {pipeline_mode = #tpu.pipeline_mode<synchronous>, transform_indices = @transform_1, window_bounds = array<i64: 2, 64, 32>}, {pipeline_mode = #tpu.pipeline_mode<synchronous>, transform_indices = @transform_2, window_bounds = array<i64: 2, 32, 48>}, {pipeline_mode = #tpu.pipeline_mode<synchronous>, transform_indices = @transform_3, window_bounds = array<i64: 2, 48, 32>}, {pipeline_mode = #tpu.pipeline_mode<synchronous>, transform_indices = @transform_4, window_bounds = array<i64: 16, 256>}, {pipeline_mode = #tpu.pipeline_mode<synchronous>, transform_indices = @transform_5, window_bounds = array<i64: 64, 256>}, {pipeline_mode = #tpu.pipeline_mode<synchronous>, transform_indices = @transform_6, window_bounds = array<i64: 256, 48>}, {pipeline_mode = #tpu.pipeline_mode<synchronous>, transform_indices = @transform_7, window_bounds = array<i64: 48, 3>}, {pipeline_mode = #tpu.pipeline_mode<synchronous>, transform_indices = @transform_8, window_bounds = array<i64: 3, 48>}, {pipeline_mode = #tpu.pipeline_mode<synchronous>, transform_indices = @transform_9, window_bounds = array<i64: 64, 32>}, {pipeline_mode = #tpu.pipeline_mode<synchronous>, transform_indices = @transform_10, window_bounds = array<i64: 16, 64>}, {pipeline_mode = #tpu.pipeline_mode<synchronous>, transform_indices = @transform_11, window_bounds = array<i64: 16, 3>}, {pipeline_mode = #tpu.pipeline_mode<synchronous>, transform_indices = @transform_12, window_bounds = array<i64: 16, 1>}, {pipeline_mode = #tpu.pipeline_mode<synchronous>, transform_indices = @transform_13, window_bounds = array<i64: 16, 16>}, {pipeline_mode = #tpu.pipeline_mode<synchronous>, transform_indices = @transform_14, window_bounds = array<i64: 16, 1>}, {pipeline_mode = #tpu.pipeline_mode<synchronous>, transform_indices = @transform_15, window_bounds = array<i64: 64, 16>}, {pipeline_mode = #tpu.pipeline_mode<synchronous>, transform_indices = @transform_16, window_bounds = array<i64: 64, 1>}, {pipeline_mode = #tpu.pipeline_mode<synchronous>, transform_indices = @transform_17, window_bounds = array<i64: 32, 32>}, {pipeline_mode = #tpu.pipeline_mode<synchronous>, transform_indices = @transform_18, window_bounds = array<i64: 1, 32>}, {pipeline_mode = #tpu.pipeline_mode<synchronous>, transform_indices = @transform_19, window_bounds = array<i64: 2, 16, 32>}]} {
    %c0_i32 = arith.constant 0 : i32
    %c2_i32 = arith.constant 2 : i32
    %0 = arith.addi %c0_i32, %c2_i32 : i32
    %c1_i32 = arith.constant 1 : i32
    scf.for %arg21 = %c0_i32 to %0 step %c1_i32  : i32 {
      %c1_i32_1 = arith.constant 1 : i32
      %1 = arith.muli %arg21, %c1_i32_1 : i32
      %c0_i32_2 = arith.constant 0 : i32
      %2 = arith.addi %c0_i32_2, %1 : i32
      %3 = arith.index_cast %2 : i32 to index
      %c0 = arith.constant 0 : index
      %c0_3 = arith.constant 0 : index
      %4 = vector.load %arg1[%3, %c0, %c0_3] : memref<2x3x16xf32, #tpu.memory_space<vmem>>, vector<1x3x16xf32>
      %5 = vector.shape_cast %4 : vector<1x3x16xf32> to vector<3x16xf32>
      %c0_4 = arith.constant 0 : index
      %c0_5 = arith.constant 0 : index
      %6 = vector.load %arg5[%c0_4, %c0_5] : memref<16x256xf32, #tpu.memory_space<vmem>>, vector<16x256xf32>
      %cst = arith.constant dense<0.000000e+00> : vector<3x256xf32>
      %7 = tpu.matmul %5, %6, %cst {dimension_numbers = #tpu.dot_dimension_numbers<[1], [0], [0], [1], [0, 0, 1, 1], [], []>} : vector<3x16xf32>, vector<16x256xf32>, vector<3x256xf32> -> vector<3x256xf32>
      %8 = vector.extract_strided_slice %7 {offsets = [0, 0], sizes = [1, 256], strides = [1, 1]} : vector<3x256xf32> to vector<1x256xf32>
      %9 = vector.extract_strided_slice %7 {offsets = [0, 0], sizes = [1, 256], strides = [1, 1]} : vector<3x256xf32> to vector<1x256xf32>
      %10 = arith.mulf %8, %9 : vector<1x256xf32>
      %11 = vector.extract_strided_slice %7 {offsets = [1, 0], sizes = [1, 256], strides = [1, 1]} : vector<3x256xf32> to vector<1x256xf32>
      %12 = vector.extract_strided_slice %7 {offsets = [1, 0], sizes = [1, 256], strides = [1, 1]} : vector<3x256xf32> to vector<1x256xf32>
      %13 = arith.mulf %11, %12 : vector<1x256xf32>
      %14 = arith.addf %10, %13 : vector<1x256xf32>
      %15 = vector.extract_strided_slice %7 {offsets = [2, 0], sizes = [1, 256], strides = [1, 1]} : vector<3x256xf32> to vector<1x256xf32>
      %16 = vector.extract_strided_slice %7 {offsets = [2, 0], sizes = [1, 256], strides = [1, 1]} : vector<3x256xf32> to vector<1x256xf32>
      %17 = arith.mulf %15, %16 : vector<1x256xf32>
      %18 = arith.addf %14, %17 : vector<1x256xf32>
      %19 = math.sqrt %18 : vector<1x256xf32>
      %cst_6 = arith.constant 9.99999997E-7 : f32
      %20 = vector.broadcast %cst_6 : f32 to vector<1x256xf32>
      %21 = arith.addf %19, %20 : vector<1x256xf32>
      %22 = vector.broadcast %21 : vector<1x256xf32> to vector<3x256xf32>
      %23 = arith.divf %7, %22 : vector<3x256xf32>
      %24 = vector.extract_strided_slice %23 {offsets = [0, 0], sizes = [1, 256], strides = [1, 1]} : vector<3x256xf32> to vector<1x256xf32>
      %25 = vector.extract_strided_slice %23 {offsets = [0, 0], sizes = [1, 256], strides = [1, 1]} : vector<3x256xf32> to vector<1x256xf32>
      %26 = arith.mulf %24, %25 : vector<1x256xf32>
      %27 = vector.extract_strided_slice %23 {offsets = [1, 0], sizes = [1, 256], strides = [1, 1]} : vector<3x256xf32> to vector<1x256xf32>
      %28 = vector.extract_strided_slice %23 {offsets = [1, 0], sizes = [1, 256], strides = [1, 1]} : vector<3x256xf32> to vector<1x256xf32>
      %29 = arith.mulf %27, %28 : vector<1x256xf32>
      %30 = arith.addf %26, %29 : vector<1x256xf32>
      %31 = vector.extract_strided_slice %23 {offsets = [2, 0], sizes = [1, 256], strides = [1, 1]} : vector<3x256xf32> to vector<1x256xf32>
      %32 = vector.extract_strided_slice %23 {offsets = [2, 0], sizes = [1, 256], strides = [1, 1]} : vector<3x256xf32> to vector<1x256xf32>
      %33 = arith.mulf %31, %32 : vector<1x256xf32>
      %34 = arith.addf %30, %33 : vector<1x256xf32>
      %35 = math.sqrt %34 : vector<1x256xf32>
      %cst_7 = arith.constant 9.99999996E-13 : f32
      %36 = vector.broadcast %cst_7 : f32 to vector<1x256xf32>
      %37 = arith.maximumf %35, %36 : vector<1x256xf32>
      %38 = vector.broadcast %37 : vector<1x256xf32> to vector<3x256xf32>
      %39 = arith.divf %23, %38 : vector<3x256xf32>
      %c0_8 = arith.constant 0 : index
      %c0_9 = arith.constant 0 : index
      %40 = vector.load %arg12[%c0_8, %c0_9] : memref<16x3xf32, #tpu.memory_space<vmem>>, vector<16x3xf32>
      %cst_10 = arith.constant dense<0.000000e+00> : vector<16x256xf32>
      %41 = tpu.matmul %40, %39, %cst_10 {dimension_numbers = #tpu.dot_dimension_numbers<[1], [0], [0], [1], [0, 0, 1, 1], [], []>} : vector<16x3xf32>, vector<3x256xf32>, vector<16x256xf32> -> vector<16x256xf32>
      %c0_11 = arith.constant 0 : index
      %c0_12 = arith.constant 0 : index
      %42 = vector.load %arg13[%c0_11, %c0_12] : memref<16x1xf32, #tpu.memory_space<vmem>>, vector<16x1xf32>
      %43 = vector.broadcast %42 : vector<16x1xf32> to vector<16x256xf32>
      %44 = arith.addf %41, %43 : vector<16x256xf32>
      %45 = arith.negf %44 : vector<16x256xf32>
      %46 = math.exp %45 : vector<16x256xf32>
      %cst_13 = arith.constant 1.000000e+00 : f32
      %47 = vector.broadcast %cst_13 : f32 to vector<16x256xf32>
      %48 = arith.addf %47, %46 : vector<16x256xf32>
      %49 = arith.divf %47, %48 : vector<16x256xf32>
      %50 = arith.mulf %44, %49 : vector<16x256xf32>
      %c0_14 = arith.constant 0 : index
      %c0_15 = arith.constant 0 : index
      %51 = vector.load %arg14[%c0_14, %c0_15] : memref<16x16xf32, #tpu.memory_space<vmem>>, vector<16x16xf32>
      %cst_16 = arith.constant dense<0.000000e+00> : vector<16x256xf32>
      %52 = tpu.matmul %51, %50, %cst_16 {dimension_numbers = #tpu.dot_dimension_numbers<[1], [0], [0], [1], [0, 0, 1, 1], [], []>} : vector<16x16xf32>, vector<16x256xf32>, vector<16x256xf32> -> vector<16x256xf32>
      %c0_17 = arith.constant 0 : index
      %c0_18 = arith.constant 0 : index
      %53 = vector.load %arg15[%c0_17, %c0_18] : memref<16x1xf32, #tpu.memory_space<vmem>>, vector<16x1xf32>
      %54 = vector.broadcast %53 : vector<16x1xf32> to vector<16x256xf32>
      %55 = arith.addf %52, %54 : vector<16x256xf32>
      %56 = arith.negf %55 : vector<16x256xf32>
      %57 = math.exp %56 : vector<16x256xf32>
      %cst_19 = arith.constant 1.000000e+00 : f32
      %58 = vector.broadcast %cst_19 : f32 to vector<16x256xf32>
      %59 = arith.addf %58, %57 : vector<16x256xf32>
      %60 = arith.divf %58, %59 : vector<16x256xf32>
      %61 = arith.mulf %55, %60 : vector<16x256xf32>
      %c0_20 = arith.constant 0 : index
      %c0_21 = arith.constant 0 : index
      %62 = vector.load %arg16[%c0_20, %c0_21] : memref<64x16xf32, #tpu.memory_space<vmem>>, vector<64x16xf32>
      %cst_22 = arith.constant dense<0.000000e+00> : vector<64x256xf32>
      %63 = tpu.matmul %62, %61, %cst_22 {dimension_numbers = #tpu.dot_dimension_numbers<[1], [0], [0], [1], [0, 0, 1, 1], [], []>} : vector<64x16xf32>, vector<16x256xf32>, vector<64x256xf32> -> vector<64x256xf32>
      %c0_23 = arith.constant 0 : index
      %c0_24 = arith.constant 0 : index
      %64 = vector.load %arg6[%c0_23, %c0_24] : memref<64x256xf32, #tpu.memory_space<vmem>>, vector<64x256xf32>
      %65 = arith.mulf %63, %64 : vector<64x256xf32>
      %c0_25 = arith.constant 0 : index
      %c0_26 = arith.constant 0 : index
      %66 = vector.load %arg7[%c0_25, %c0_26] : memref<256x48xf32, #tpu.memory_space<vmem>>, vector<256x48xf32>
      %cst_27 = arith.constant dense<0.000000e+00> : vector<64x48xf32>
      %67 = tpu.matmul %65, %66, %cst_27 {dimension_numbers = #tpu.dot_dimension_numbers<[1], [0], [0], [1], [0, 0, 1, 1], [], []>} : vector<64x256xf32>, vector<256x48xf32>, vector<64x48xf32> -> vector<64x48xf32>
      %c0_28 = arith.constant 0 : index
      %c0_29 = arith.constant 0 : index
      %68 = vector.load %arg17[%c0_28, %c0_29] : memref<64x1xf32, #tpu.memory_space<vmem>>, vector<64x1xf32>
      %69 = vector.broadcast %68 : vector<64x1xf32> to vector<64x48xf32>
      %70 = arith.addf %67, %69 : vector<64x48xf32>
      %71 = arith.index_cast %2 : i32 to index
      %c0_30 = arith.constant 0 : index
      %c0_31 = arith.constant 0 : index
      %72 = vector.load %arg2[%71, %c0_30, %c0_31] : memref<2x64x32xf32, #tpu.memory_space<vmem>>, vector<1x64x32xf32>
      %73 = vector.shape_cast %72 : vector<1x64x32xf32> to vector<64x32xf32>
      %74 = arith.index_cast %2 : i32 to index
      %c0_32 = arith.constant 0 : index
      %c0_33 = arith.constant 0 : index
      %75 = vector.load %arg3[%74, %c0_32, %c0_33] : memref<2x32x48xf32, #tpu.memory_space<vmem>>, vector<1x32x48xf32>
      %76 = vector.shape_cast %75 : vector<1x32x48xf32> to vector<32x48xf32>
      %cst_34 = arith.constant dense<0.000000e+00> : vector<64x48xf32>
      %77 = tpu.matmul %73, %76, %cst_34 {dimension_numbers = #tpu.dot_dimension_numbers<[1], [0], [0], [1], [0, 0, 1, 1], [], []>} : vector<64x32xf32>, vector<32x48xf32>, vector<64x48xf32> -> vector<64x48xf32>
      %78 = arith.addf %77, %70 : vector<64x48xf32>
      %cst_35 = arith.constant dense<0xFF800000> : vector<64xf32>
      %79 = vector.multi_reduction <maximumf>, %78, %cst_35 [1] : vector<64x48xf32> to vector<64xf32>
      %80 = vector.shape_cast %79 : vector<64xf32> to vector<64x1xf32>
      %81 = vector.broadcast %80 : vector<64x1xf32> to vector<64x48xf32>
      %82 = arith.subf %78, %81 : vector<64x48xf32>
      %83 = math.exp %82 : vector<64x48xf32>
      %c0_36 = arith.constant 0 : index
      %c0_37 = arith.constant 0 : index
      %84 = vector.load %arg8[%c0_36, %c0_37] : memref<48x3xf32, #tpu.memory_space<vmem>>, vector<48x3xf32>
      %cst_38 = arith.constant dense<0.000000e+00> : vector<64x3xf32>
      %85 = tpu.matmul %83, %84, %cst_38 {dimension_numbers = #tpu.dot_dimension_numbers<[1], [0], [0], [1], [0, 0, 1, 1], [], []>} : vector<64x48xf32>, vector<48x3xf32>, vector<64x3xf32> -> vector<64x3xf32>
      %86 = tpu.reciprocal %85 {approx = true} : vector<64x3xf32> -> vector<64x3xf32>
      %c0_39 = arith.constant 0 : index
      %c0_40 = arith.constant 0 : index
      %87 = vector.load %arg9[%c0_39, %c0_40] : memref<3x48xf32, #tpu.memory_space<vmem>>, vector<3x48xf32>
      %cst_41 = arith.constant dense<0.000000e+00> : vector<64x48xf32>
      %88 = tpu.matmul %86, %87, %cst_41 {dimension_numbers = #tpu.dot_dimension_numbers<[1], [0], [0], [1], [0, 0, 1, 1], [], []>} : vector<64x3xf32>, vector<3x48xf32>, vector<64x48xf32> -> vector<64x48xf32>
      %89 = arith.mulf %83, %88 : vector<64x48xf32>
      %90 = arith.index_cast %2 : i32 to index
      %c0_42 = arith.constant 0 : index
      %c0_43 = arith.constant 0 : index
      %91 = vector.load %arg4[%90, %c0_42, %c0_43] : memref<2x48x32xf32, #tpu.memory_space<vmem>>, vector<1x48x32xf32>
      %92 = vector.shape_cast %91 : vector<1x48x32xf32> to vector<48x32xf32>
      %cst_44 = arith.constant dense<0.000000e+00> : vector<64x32xf32>
      %93 = tpu.matmul %89, %92, %cst_44 {dimension_numbers = #tpu.dot_dimension_numbers<[1], [0], [0], [1], [0, 0, 1, 1], [], []>} : vector<64x48xf32>, vector<48x32xf32>, vector<64x32xf32> -> vector<64x32xf32>
      %c0_45 = arith.constant 0 : index
      %c0_46 = arith.constant 0 : index
      %94 = vector.load %arg10[%c0_45, %c0_46] : memref<64x32xf32, #tpu.memory_space<vmem>>, vector<64x32xf32>
      %95 = arith.mulf %93, %94 : vector<64x32xf32>
      %c0_47 = arith.constant 0 : index
      %c0_48 = arith.constant 0 : index
      %96 = vector.load %arg11[%c0_47, %c0_48] : memref<16x64xf32, #tpu.memory_space<vmem>>, vector<16x64xf32>
      %cst_49 = arith.constant dense<0.000000e+00> : vector<16x32xf32>
      %97 = tpu.matmul %96, %95, %cst_49 {dimension_numbers = #tpu.dot_dimension_numbers<[1], [0], [0], [1], [0, 0, 1, 1], [], []>} : vector<16x64xf32>, vector<64x32xf32>, vector<16x32xf32> -> vector<16x32xf32>
      %c0_50 = arith.constant 0 : index
      %c0_51 = arith.constant 0 : index
      %98 = vector.load %arg18[%c0_50, %c0_51] : memref<32x32xf32, #tpu.memory_space<vmem>>, vector<32x32xf32>
      %cst_52 = arith.constant dense<0.000000e+00> : vector<16x32xf32>
      %99 = tpu.matmul %97, %98, %cst_52 {dimension_numbers = #tpu.dot_dimension_numbers<[1], [0], [0], [1], [0, 0, 1, 1], [], []>} : vector<16x32xf32>, vector<32x32xf32>, vector<16x32xf32> -> vector<16x32xf32>
      %c0_53 = arith.constant 0 : index
      %c0_54 = arith.constant 0 : index
      %100 = vector.load %arg19[%c0_53, %c0_54] : memref<1x32xf32, #tpu.memory_space<vmem>>, vector<1x32xf32>
      %101 = vector.broadcast %100 : vector<1x32xf32> to vector<16x32xf32>
      %102 = arith.addf %99, %101 : vector<16x32xf32>
      %103 = arith.index_cast %2 : i32 to index
      %c0_55 = arith.constant 0 : index
      %c0_56 = arith.constant 0 : index
      %104 = vector.load %arg20[%103, %c0_55, %c0_56] : memref<2x16x32xf32, #tpu.memory_space<vmem>>, vector<1x16x32xf32>
      %105 = vector.shape_cast %104 : vector<1x16x32xf32> to vector<16x32xf32>
      %106 = vector.shape_cast %102 : vector<16x32xf32> to vector<1x16x32xf32>
      tpu.vector_store %arg20[%103, %c0_55, %c0_56], %106 {strides = array<i32>} : memref<2x16x32xf32, #tpu.memory_space<vmem>>, vector<1x16x32xf32>,
    }
    %c2_i32_0 = arith.constant 2 : i32
    return
  }
  func.func @transform_0(%arg0: i32) -> (i32, i32, i32) {
    %c0_i32 = arith.constant 0 : i32
    %c0_i32_0 = arith.constant 0 : i32
    %c0_i32_1 = arith.constant 0 : i32
    %c0_i32_2 = arith.constant 0 : i32
    return %c0_i32, %c0_i32_0, %c0_i32_1 : i32, i32, i32
  }
  func.func @transform_1(%arg0: i32) -> (i32, i32, i32) {
    %c0_i32 = arith.constant 0 : i32
    %c0_i32_0 = arith.constant 0 : i32
    %c0_i32_1 = arith.constant 0 : i32
    %c0_i32_2 = arith.constant 0 : i32
    return %c0_i32, %c0_i32_0, %c0_i32_1 : i32, i32, i32
  }
  func.func @transform_2(%arg0: i32) -> (i32, i32, i32) {
    %c0_i32 = arith.constant 0 : i32
    %c0_i32_0 = arith.constant 0 : i32
    %c0_i32_1 = arith.constant 0 : i32
    %c0_i32_2 = arith.constant 0 : i32
    return %c0_i32, %c0_i32_0, %c0_i32_1 : i32, i32, i32
  }
  func.func @transform_3(%arg0: i32) -> (i32, i32, i32) {
    %c0_i32 = arith.constant 0 : i32
    %c0_i32_0 = arith.constant 0 : i32
    %c0_i32_1 = arith.constant 0 : i32
    %c0_i32_2 = arith.constant 0 : i32
    return %c0_i32, %c0_i32_0, %c0_i32_1 : i32, i32, i32
  }
  func.func @transform_4(%arg0: i32) -> (i32, i32) {
    %c0_i32 = arith.constant 0 : i32
    %c0_i32_0 = arith.constant 0 : i32
    %c0_i32_1 = arith.constant 0 : i32
    return %c0_i32, %c0_i32_0 : i32, i32
  }
  func.func @transform_5(%arg0: i32) -> (i32, i32) {
    %c0_i32 = arith.constant 0 : i32
    %c0_i32_0 = arith.constant 0 : i32
    %c0_i32_1 = arith.constant 0 : i32
    return %c0_i32, %c0_i32_0 : i32, i32
  }
  func.func @transform_6(%arg0: i32) -> (i32, i32) {
    %c0_i32 = arith.constant 0 : i32
    %c0_i32_0 = arith.constant 0 : i32
    %c0_i32_1 = arith.constant 0 : i32
    return %c0_i32, %c0_i32_0 : i32, i32
  }
  func.func @transform_7(%arg0: i32) -> (i32, i32) {
    %c0_i32 = arith.constant 0 : i32
    %c0_i32_0 = arith.constant 0 : i32
    %c0_i32_1 = arith.constant 0 : i32
    return %c0_i32, %c0_i32_0 : i32, i32
  }
  func.func @transform_8(%arg0: i32) -> (i32, i32) {
    %c0_i32 = arith.constant 0 : i32
    %c0_i32_0 = arith.constant 0 : i32
    %c0_i32_1 = arith.constant 0 : i32
    return %c0_i32, %c0_i32_0 : i32, i32
  }
  func.func @transform_9(%arg0: i32) -> (i32, i32) {
    %c0_i32 = arith.constant 0 : i32
    %c0_i32_0 = arith.constant 0 : i32
    %c0_i32_1 = arith.constant 0 : i32
    return %c0_i32, %c0_i32_0 : i32, i32
  }
  func.func @transform_10(%arg0: i32) -> (i32, i32) {
    %c0_i32 = arith.constant 0 : i32
    %c0_i32_0 = arith.constant 0 : i32
    %c0_i32_1 = arith.constant 0 : i32
    return %c0_i32, %c0_i32_0 : i32, i32
  }
  func.func @transform_11(%arg0: i32) -> (i32, i32) {
    %c0_i32 = arith.constant 0 : i32
    %c0_i32_0 = arith.constant 0 : i32
    %c0_i32_1 = arith.constant 0 : i32
    return %c0_i32, %c0_i32_0 : i32, i32
  }
  func.func @transform_12(%arg0: i32) -> (i32, i32) {
    %c0_i32 = arith.constant 0 : i32
    %c0_i32_0 = arith.constant 0 : i32
    %c0_i32_1 = arith.constant 0 : i32
    return %c0_i32, %c0_i32_0 : i32, i32
  }
  func.func @transform_13(%arg0: i32) -> (i32, i32) {
    %c0_i32 = arith.constant 0 : i32
    %c0_i32_0 = arith.constant 0 : i32
    %c0_i32_1 = arith.constant 0 : i32
    return %c0_i32, %c0_i32_0 : i32, i32
  }
  func.func @transform_14(%arg0: i32) -> (i32, i32) {
    %c0_i32 = arith.constant 0 : i32
    %c0_i32_0 = arith.constant 0 : i32
    %c0_i32_1 = arith.constant 0 : i32
    return %c0_i32, %c0_i32_0 : i32, i32
  }
  func.func @transform_15(%arg0: i32) -> (i32, i32) {
    %c0_i32 = arith.constant 0 : i32
    %c0_i32_0 = arith.constant 0 : i32
    %c0_i32_1 = arith.constant 0 : i32
    return %c0_i32, %c0_i32_0 : i32, i32
  }
  func.func @transform_16(%arg0: i32) -> (i32, i32) {
    %c0_i32 = arith.constant 0 : i32
    %c0_i32_0 = arith.constant 0 : i32
    %c0_i32_1 = arith.constant 0 : i32
    return %c0_i32, %c0_i32_0 : i32, i32
  }
  func.func @transform_17(%arg0: i32) -> (i32, i32) {
    %c0_i32 = arith.constant 0 : i32
    %c0_i32_0 = arith.constant 0 : i32
    %c0_i32_1 = arith.constant 0 : i32
    return %c0_i32, %c0_i32_0 : i32, i32
  }
  func.func @transform_18(%arg0: i32) -> (i32, i32) {
    %c0_i32 = arith.constant 0 : i32
    %c0_i32_0 = arith.constant 0 : i32
    %c0_i32_1 = arith.constant 0 : i32
    return %c0_i32, %c0_i32_0 : i32, i32
  }
  func.func @transform_19(%arg0: i32) -> (i32, i32, i32) {
    %c0_i32 = arith.constant 0 : i32
    %c0_i32_0 = arith.constant 0 : i32
    %c0_i32_1 = arith.constant 0 : i32
    %c0_i32_2 = arith.constant 0 : i32
    return %c0_i32, %c0_i32_0, %c0_i32_1 : i32, i32, i32
  }
}

</mosaic_0001>

<llo_original>
// kernel: tpu_custom_call.1
$region0: #{tpu_custom_call.1}
  #allocation0 [shape = 'u32[]', space=smem, size = 0x4, offset = 0x4, fixed_abs, tag = 'smem constant byte address 0x4 - core index']
  #allocation1 [shape = 'u32[144,128]{1,0:T(1,128)}', space=vmem, size = 0x12000, scoped, tag = 'internal scratch']
  %s0 = inlined_call_operand.vmem [shape: f32[2,3,16], index: 0, kind: input, shape index: {}]
  %s1 = inlined_call_operand.vmem [shape: f32[2,64,32], index: 1, kind: input, shape index: {}]
  %s2 = inlined_call_operand.vmem [shape: f32[2,32,48], index: 2, kind: input, shape index: {}]
  %s3 = inlined_call_operand.vmem [shape: f32[2,48,32], index: 3, kind: input, shape index: {}]
  %s4 = inlined_call_operand.vmem [shape: f32[16,256], index: 4, kind: input, shape index: {}]
  %s5 = inlined_call_operand.vmem [shape: f32[64,256], index: 5, kind: input, shape index: {}]
  %s6 = inlined_call_operand.vmem [shape: f32[256,48], index: 6, kind: input, shape index: {}]
  %s7 = inlined_call_operand.vmem [shape: f32[48,3], index: 7, kind: input, shape index: {}]
  %s8 = inlined_call_operand.vmem [shape: f32[3,48], index: 8, kind: input, shape index: {}]
  %s9 = inlined_call_operand.vmem [shape: f32[64,32], index: 9, kind: input, shape index: {}]
  %s10 = inlined_call_operand.vmem [shape: f32[16,64], index: 10, kind: input, shape index: {}]
  %s11 = inlined_call_operand.vmem [shape: f32[16,3], index: 11, kind: input, shape index: {}]
  %s12 = inlined_call_operand.vmem [shape: f32[16,1], index: 12, kind: input, shape index: {}]
  %s13 = inlined_call_operand.vmem [shape: f32[16,16], index: 13, kind: input, shape index: {}]
  %s14 = inlined_call_operand.vmem [shape: f32[16,1], index: 14, kind: input, shape index: {}]
  %s15 = inlined_call_operand.vmem [shape: f32[64,16], index: 15, kind: input, shape index: {}]
  %s16 = inlined_call_operand.vmem [shape: f32[64,1], index: 16, kind: input, shape index: {}]
  %s17 = inlined_call_operand.vmem [shape: f32[32,32], index: 17, kind: input, shape index: {}]
  %s18 = inlined_call_operand.vmem [shape: f32[1,32], index: 18, kind: input, shape index: {}]
  %s19 = inlined_call_operand.hbm [shape: f32[2,16,32], index: 19, kind: output, shape index: {}]
  %s20 = sld [smem:[#allocation0]]
  $region93: #{tpu_custom_call.1} parent=0
    _
  %s22 = ssub.s32 1, %s20
  %s23 = scalar_select 0, %s22, %s20
  $region1: #{tpu_custom_call.1} parent=0
    #allocation2 [shape = 'u8[16384]{0}', space=vmem, size = 0x4000, scoped, tag = 'output window, operand 0, single buffered']
    #allocation3 [shape = 's32[1]{0}', space=sflag, size = 0x4, scoped, tag = 'scoped memory for tpu_custom_call.1']
    %24 = vsyncpa [#allocation3], 0
    // Predicated region
    $region2: #{tpu_custom_call.1} parent=1 // pred_check
      _
    $region3: #{tpu_custom_call.1} parent=1 // pred_check_branch
      %26 = sbr.rel (0) target = $region5
    $region4: #{tpu_custom_call.1} parent=1 // pred_region
      _
    $region5: #{tpu_custom_call.1} parent=1 // pred_fallthru
      _
    // Predicated region
    $region6: #{tpu_custom_call.1} parent=1 // pred_check
      _
    $region7: #{tpu_custom_call.1} parent=1 // pred_check_branch
      %28 = sbr.rel (0) target = $region9
    $region8: #{tpu_custom_call.1} parent=1 // pred_region
      _
    $region9: #{tpu_custom_call.1} parent=1 // pred_fallthru
      _
    // Predicated region
    $region10: #{tpu_custom_call.1} parent=1 // pred_check
      _
    $region11: #{tpu_custom_call.1} parent=1 // pred_check_branch
      %30 = sbr.rel (0) target = $region13
    $region12: #{tpu_custom_call.1} parent=1 // pred_region
      _
    $region13: #{tpu_custom_call.1} parent=1 // pred_fallthru
      _
    // Predicated region
    $region14: #{tpu_custom_call.1} parent=1 // pred_check
      _
    $region15: #{tpu_custom_call.1} parent=1 // pred_check_branch
      %32 = sbr.rel (0) target = $region17
    $region16: #{tpu_custom_call.1} parent=1 // pred_region
      _
    $region17: #{tpu_custom_call.1} parent=1 // pred_fallthru
      _
    // Predicated region
    $region18: #{tpu_custom_call.1} parent=1 // pred_check
      _
    $region19: #{tpu_custom_call.1} parent=1 // pred_check_branch
      %34 = sbr.rel (0) target = $region21
    $region20: #{tpu_custom_call.1} parent=1 // pred_region
      _
    $region21: #{tpu_custom_call.1} parent=1 // pred_fallthru
      _
    // Predicated region
    $region22: #{tpu_custom_call.1} parent=1 // pred_check
      _
    $region23: #{tpu_custom_call.1} parent=1 // pred_check_branch
      %36 = sbr.rel (0) target = $region25
    $region24: #{tpu_custom_call.1} parent=1 // pred_region
      _
    $region25: #{tpu_custom_call.1} parent=1 // pred_fallthru
      _
    // Predicated region
    $region26: #{tpu_custom_call.1} parent=1 // pred_check
      _
    $region27: #{tpu_custom_call.1} parent=1 // pred_check_branch
      %38 = sbr.rel (0) target = $region29
    $region28: #{tpu_custom_call.1} parent=1 // pred_region
      _
    $region29: #{tpu_custom_call.1} parent=1 // pred_fallthru
      _
    // Predicated region
    $region30: #{tpu_custom_call.1} parent=1 // pred_check
      _
    $region31: #{tpu_custom_call.1} parent=1 // pred_check_branch
      %40 = sbr.rel (0) target = $region33
    $region32: #{tpu_custom_call.1} parent=1 // pred_region
      _
    $region33: #{tpu_custom_call.1} parent=1 // pred_fallthru
      _
    // Predicated region
    $region34: #{tpu_custom_call.1} parent=1 // pred_check
      _
    $region35: #{tpu_custom_call.1} parent=1 // pred_check_branch
      %42 = sbr.rel (0) target = $region37
    $region36: #{tpu_custom_call.1} parent=1 // pred_region
      _
    $region37: #{tpu_custom_call.1} parent=1 // pred_fallthru
      _
    // Predicated region
    $region38: #{tpu_custom_call.1} parent=1 // pred_check
      _
    $region39: #{tpu_custom_call.1} parent=1 // pred_check_branch
      %44 = sbr.rel (0) target = $region41
    $region40: #{tpu_custom_call.1} parent=1 // pred_region
      _
    $region41: #{tpu_custom_call.1} parent=1 // pred_fallthru
      _
    // Predicated region
    $region42: #{tpu_custom_call.1} parent=1 // pred_check
      _
    $region43: #{tpu_custom_call.1} parent=1 // pred_check_branch
      %46 = sbr.rel (0) target = $region45
    $region44: #{tpu_custom_call.1} parent=1 // pred_region
      _
    $region45: #{tpu_custom_call.1} parent=1 // pred_fallthru
      _
    // Predicated region
    $region46: #{tpu_custom_call.1} parent=1 // pred_check
      _
    $region47: #{tpu_custom_call.1} parent=1 // pred_check_branch
      %48 = sbr.rel (0) target = $region49
    $region48: #{tpu_custom_call.1} parent=1 // pred_region
      _
    $region49: #{tpu_custom_call.1} parent=1 // pred_fallthru
      _
    // Predicated region
    $region50: #{tpu_custom_call.1} parent=1 // pred_check
      _
    $region51: #{tpu_custom_call.1} parent=1 // pred_check_branch
      %50 = sbr.rel (0) target = $region53
    $region52: #{tpu_custom_call.1} parent=1 // pred_region
      _
    $region53: #{tpu_custom_call.1} parent=1 // pred_fallthru
      _
    // Predicated region
    $region54: #{tpu_custom_call.1} parent=1 // pred_check
      _
    $region55: #{tpu_custom_call.1} parent=1 // pred_check_branch
      %52 = sbr.rel (0) target = $region57
    $region56: #{tpu_custom_call.1} parent=1 // pred_region
      _
    $region57: #{tpu_custom_call.1} parent=1 // pred_fallthru
      _
    // Predicated region
    $region58: #{tpu_custom_call.1} parent=1 // pred_check
      _
    $region59: #{tpu_custom_call.1} parent=1 // pred_check_branch
      %54 = sbr.rel (0) target = $region61
    $region60: #{tpu_custom_call.1} parent=1 // pred_region
      _
    $region61: #{tpu_custom_call.1} parent=1 // pred_fallthru
      _
    // Predicated region
    $region62: #{tpu_custom_call.1} parent=1 // pred_check
      _
    $region63: #{tpu_custom_call.1} parent=1 // pred_check_branch
      %56 = sbr.rel (0) target = $region65
    $region64: #{tpu_custom_call.1} parent=1 // pred_region
      _
    $region65: #{tpu_custom_call.1} parent=1 // pred_fallthru
      _
    // Predicated region
    $region66: #{tpu_custom_call.1} parent=1 // pred_check
      _
    $region67: #{tpu_custom_call.1} parent=1 // pred_check_branch
      %58 = sbr.rel (0) target = $region69
    $region68: #{tpu_custom_call.1} parent=1 // pred_region
      _
    $region69: #{tpu_custom_call.1} parent=1 // pred_fallthru
      _
    // Predicated region
    $region70: #{tpu_custom_call.1} parent=1 // pred_check
      _
    $region71: #{tpu_custom_call.1} parent=1 // pred_check_branch
      %60 = sbr.rel (0) target = $region73
    $region72: #{tpu_custom_call.1} parent=1 // pred_region
      _
    $region73: #{tpu_custom_call.1} parent=1 // pred_fallthru
      _
    // Predicated region
    $region74: #{tpu_custom_call.1} parent=1 // pred_check
      _
    $region75: #{tpu_custom_call.1} parent=1 // pred_check_branch
      %62 = sbr.rel (0) target = $region77
    $region76: #{tpu_custom_call.1} parent=1 // pred_region
      _
    $region77: #{tpu_custom_call.1} parent=1 // pred_fallthru
      _
    loop: start=0, step=1, limit=2
    $region78: #{tpu_custom_call.1} parent=1 // loop_pre_header
      _
    $region79: #{tpu_custom_call.1} parent=1 // loop_header
      %s64 = sphi 0, %s68
      %p65 = scmp.ge.s32.totalorder %s64, 2
    $region80: #{tpu_custom_call.1} parent=1 // loop_header_branch
      %67 = sbr.rel (%p65) target = $region84
    $region81: #{tpu_custom_call.1} parent=1 // loop_body
      %s69 = smul.u32 %s64, 4
      %s70 = scalar_lea.vmem %s0, %s69
      %v71 = vld [vmem:[%s70] sm:$0x7]
      %v72 = vld [vmem:[%s4] sm:$0xff]
      %v73 = vld [vmem:[%s4 + $0x8] sm:$0xff]
      %v74 = vld [vmem:[%s4 + $0x10] sm:$0xff]
      %v75 = vld [vmem:[%s4 + $0x18] sm:$0xff]
      %vm76 = vcmask 130048
      %v78 = vsel %vm76, %v71, 0
      %80 = vmatprep.subr.mxu0 0.0
      %81 = vmatpush1.msra.mxu0 0.0
      %82 = vmatprep.subr.mxu0 0.0
      %83 = vmatpush1.msra.mxu0 0.0
      %84 = vmatprep.subr.mxu0 0.0
      %85 = vmatpush1.msra.mxu0 0.0
      %86 = vmatprep.subr.mxu0 0.0
      %87 = vmatpush1.msra.mxu0 0.0
      %88 = vmatprep.subr.mxu0 0.0
      %89 = vmatpush1.msra.mxu0 0.0
      %90 = vmatprep.subr.mxu0 0.0
      %91 = vmatpush1.msra.mxu0 0.0
      %92 = vmatprep.subr.mxu0 0.0
      %93 = vmatpush1.msra.mxu0 0.0
      %94 = vmatprep.subr.mxu0 0.0
      %95 = vmatpush1.msra.mxu0 0.0
      %96 = vmatprep.subr.mxu0 0.0
      %97 = vmatpush1.msra.mxu0 0.0
      %98 = vmatprep.subr.mxu0 0.0
      %99 = vmatpush1.msra.mxu0 0.0
      %100 = vmatprep.subr.mxu0 0.0
      %101 = vmatpush1.msra.mxu0 0.0
      %102 = vmatprep.subr.mxu0 0.0
      %103 = vmatpush1.msra.mxu0 0.0
      %104 = vmatprep.subr.mxu0 0.0
      %105 = vmatpush1.msra.mxu0 0.0
      %106 = vmatprep.subr.mxu0 0.0
      %107 = vmatpush1.msra.mxu0 0.0
      %108 = vmatprep.subr.mxu0 %v75
      %109 = vmatpush1.msra.mxu0 %v74
      %110 = vmatprep.subr.mxu0 %v73
      %111 = vmatpush1.msra.mxu0 %v72
      %112 = vmatprep.subr.mxu0 0.0
      %113 = vmatpush2.msra.mxu0 0.0
      %114 = vmatprep.subr.mxu0 0.0
      %115 = vmatpush2.msra.mxu0 0.0
      %116 = vmatprep.subr.mxu0 0.0
      %117 = vmatpush2.msra.mxu0 0.0
      %118 = vmatprep.subr.mxu0 0.0
      %119 = vmatpush2.msra.mxu0 0.0
      %120 = vmatprep.subr.mxu0 0.0
      %121 = vmatpush2.msra.mxu0 0.0
      %122 = vmatprep.subr.mxu0 0.0
      %123 = vmatpush2.msra.mxu0 0.0
      %124 = vmatprep.subr.mxu0 0.0
      %125 = vmatpush2.msra.mxu0 0.0
      %126 = vmatprep.subr.mxu0 0.0
      %127 = vmatpush2.msra.mxu0 0.0
      %128 = vmatprep.subr.mxu0 0.0
      %129 = vmatpush2.msra.mxu0 0.0
      %130 = vmatprep.subr.mxu0 0.0
      %131 = vmatpush2.msra.mxu0 0.0
      %132 = vmatprep.subr.mxu0 0.0
      %133 = vmatpush2.msra.mxu0 0.0
      %134 = vmatprep.subr.mxu0 0.0
      %135 = vmatpush2.msra.mxu0 0.0
      %136 = vmatprep.subr.mxu0 0.0
      %137 = vmatpush2.msra.mxu0 0.0
      %138 = vmatprep.subr.mxu0 0.0
      %139 = vmatpush2.msra.mxu0 0.0
      %140 = vmatprep.subr.mxu0 0.0
      %141 = vmatpush2.msra.mxu0 0.0
      %142 = vmatprep.subr.mxu0 0.0
      %143 = vmatpush2.msra.mxu0 0.0
      %144 = vmatprep.mubr.f32.mxu0 0.0
      %145 = vmatmul.mubr.f32.gmra.mxu0 %v78
      %v146 = vpop.f32.mrf.mxu0
      %v147 = vadd.f32 0.0, %v146
      %v148 = vpop.f32.mrf.mxu0
      %v149 = vadd.f32 0.0, %v148
      %150 = vdwg.mxu0
      %v151 = vmul.f32 %v147, %v147
      %v152 = vmul.f32 %v149, %v149
      %v155 = vrot.slane %v151, 1
      %v156 = vrot.slane %v152, 1
      %v159 = vadd.f32 %v151, %v155
      %v160 = vadd.f32 %v152, %v156
      %v161 = vrot.slane %v151, 2
      %v162 = vrot.slane %v152, 2
      %v165 = vadd.f32 %v159, %v161
      %v166 = vadd.f32 %v160, %v162
      %v167 = vrsqrt.pop %v165
      %v168 = vmul.f32 %v165, %v167
      %vm169 = vcmp.eq.f32.partialorder %v165, inf
      %v170 = vsel %vm169, %v165, %v168
      %vm171 = vcmp.eq.f32.partialorder %v165, 0.0
      %v172 = vand.u32 %v165, 2147483648
      %v173 = vsel %vm171, %v172, %v170
      %v174 = vrsqrt.pop %v166
      %v175 = vmul.f32 %v166, %v174
      %vm176 = vcmp.eq.f32.partialorder %v166, inf
      %v177 = vsel %vm176, %v166, %v175
      %vm178 = vcmp.eq.f32.partialorder %v166, 0.0
      %v179 = vand.u32 %v166, 2147483648
      %v180 = vsel %vm178, %v179, %v177
      %v181 = vadd.f32 %v173, 1e-06
      %v182 = vadd.f32 %v180, 1e-06
      %v183 = vlaneseq
      %v184 = vshrl.u32 %v183, 7
      %v185 = vsub.s32 0, %v184
      %v186 = vrot.slane %v181, %v185
      %v187 = vlaneseq
      %v188 = vshrl.u32 %v187, 7
      %v189 = vsub.s32 0, %v188
      %v190 = vrot.slane %v182, %v189
      %v191 = vrcp.pop %v186
      %v192 = vmul.f32 %v147, %v191
      %v193 = vrcp.pop %v190
      %v194 = vmul.f32 %v149, %v193
      %v195 = vmul.f32 %v192, %v192
      %v196 = vmul.f32 %v194, %v194
      %v199 = vrot.slane %v195, 1
      %v200 = vrot.slane %v196, 1
      %v203 = vadd.f32 %v195, %v199
      %v204 = vadd.f32 %v196, %v200
      %v205 = vrot.slane %v195, 2
      %v206 = vrot.slane %v196, 2
      %v209 = vadd.f32 %v203, %v205
      %v210 = vadd.f32 %v204, %v206
      %v211 = vrsqrt.pop %v209
      %v212 = vmul.f32 %v209, %v211
      %vm213 = vcmp.eq.f32.partialorder %v209, inf
      %v214 = vsel %vm213, %v209, %v212
      %vm215 = vcmp.eq.f32.partialorder %v209, 0.0
      %v216 = vand.u32 %v209, 2147483648
      %v217 = vsel %vm215, %v216, %v214
      %v218 = vrsqrt.pop %v210
      %v219 = vmul.f32 %v210, %v218
      %vm220 = vcmp.eq.f32.partialorder %v210, inf
      %v221 = vsel %vm220, %v210, %v219
      %vm222 = vcmp.eq.f32.partialorder %v210, 0.0
      %v223 = vand.u32 %v210, 2147483648
      %v224 = vsel %vm222, %v223, %v221
      %v225 = vmax.f32 %v217, 1e-12
      %v226 = vmax.f32 %v224, 1e-12
      %v227 = vlaneseq
      %v228 = vshrl.u32 %v227, 7
      %v229 = vsub.s32 0, %v228
      %v230 = vrot.slane %v225, %v229
      %v231 = vlaneseq
      %v232 = vshrl.u32 %v231, 7
      %v233 = vsub.s32 0, %v232
      %v234 = vrot.slane %v226, %v233
      %v235 = vrcp.pop %v230
      %v236 = vmul.f32 %v192, %v235
      %v237 = vrcp.pop %v234
      %v238 = vmul.f32 %v194, %v237
      %v239 = vld [vmem:[%s11] sm:$0xff]
      %v240 = vld [vmem:[%s11 + $0x8] sm:$0xff]
      %v241 = vld [vmem:[%s12] sm:$0xff]
      %v242 = vld [vmem:[%s12 + $0x8] sm:$0xff]
      %244 = vset.pattern.permute.xlu0 0
      %245 = vperm.xlu0 %244, %v241
      %v246 = vpop.permute.xlu0 %245
      %249 = vset.pattern.permute.xlu0 0
      %250 = vperm.xlu0 %249, %v242
      %v251 = vpop.permute.xlu0 %250
      %vm253 = vcmask 23552
      %v255 = vsel %vm253, %v239, 0
      %v258 = vsel %vm253, %v240, 0
      %vm260 = vcmask 1042432
      %v262 = vsel %vm260, %v236, 0
      %v265 = vsel %vm260, %v238, 0
      %267 = vmatprep.subr.mxu0 0.0
      %268 = vmatpush1.msra.mxu0 0.0
      %269 = vmatprep.subr.mxu0 0.0
      %270 = vmatpush1.msra.mxu0 0.0
      %271 = vmatprep.subr.mxu0 0.0
      %272 = vmatpush1.msra.mxu0 0.0
      %273 = vmatprep.subr.mxu0 0.0
      %274 = vmatpush1.msra.mxu0 0.0
      %275 = vmatprep.subr.mxu0 0.0
      %276 = vmatpush1.msra.mxu0 0.0
      %277 = vmatprep.subr.mxu0 0.0
      %278 = vmatpush1.msra.mxu0 0.0
      %279 = vmatprep.subr.mxu0 0.0
      %280 = vmatpush1.msra.mxu0 0.0
      %281 = vmatprep.subr.mxu0 0.0
      %282 = vmatpush1.msra.mxu0 0.0
      %283 = vmatprep.subr.mxu0 0.0
      %284 = vmatpush1.msra.mxu0 0.0
      %285 = vmatprep.subr.mxu0 0.0
      %286 = vmatpush1.msra.mxu0 0.0
      %287 = vmatprep.subr.mxu0 0.0
      %288 = vmatpush1.msra.mxu0 0.0
      %289 = vmatprep.subr.mxu0 0.0
      %290 = vmatpush1.msra.mxu0 0.0
      %291 = vmatprep.subr.mxu0 0.0
      %292 = vmatpush1.msra.mxu0 0.0
      %293 = vmatprep.subr.mxu0 0.0
      %294 = vmatpush1.msra.mxu0 0.0
      %295 = vmatprep.subr.mxu0 0.0
      %296 = vmatpush1.msra.mxu0 0.0
      %297 = vmatprep.subr.mxu0 %v265
      %298 = vmatpush1.msra.mxu0 %v262
      %299 = vmatprep.subr.mxu0 0.0
      %300 = vmatpush2.msra.mxu0 0.0
      %301 = vmatprep.subr.mxu0 0.0
      %302 = vmatpush2.msra.mxu0 0.0
      %303 = vmatprep.subr.mxu0 0.0
      %304 = vmatpush2.msra.mxu0 0.0
      %305 = vmatprep.subr.mxu0 0.0
      %306 = vmatpush2.msra.mxu0 0.0
      %307 = vmatprep.subr.mxu0 0.0
      %308 = vmatpush2.msra.mxu0 0.0
      %309 = vmatprep.subr.mxu0 0.0
      %310 = vmatpush2.msra.mxu0 0.0
      %311 = vmatprep.subr.mxu0 0.0
      %312 = vmatpush2.msra.mxu0 0.0
      %313 = vmatprep.subr.mxu0 0.0
      %314 = vmatpush2.msra.mxu0 0.0
      %315 = vmatprep.subr.mxu0 0.0
      %316 = vmatpush2.msra.mxu0 0.0
      %317 = vmatprep.subr.mxu0 0.0
      %318 = vmatpush2.msra.mxu0 0.0
      %319 = vmatprep.subr.mxu0 0.0
      %320 = vmatpush2.msra.mxu0 0.0
      %321 = vmatprep.subr.mxu0 0.0
      %322 = vmatpush2.msra.mxu0 0.0
      %323 = vmatprep.subr.mxu0 0.0
      %324 = vmatpush2.msra.mxu0 0.0
      %325 = vmatprep.subr.mxu0 0.0
      %326 = vmatpush2.msra.mxu0 0.0
      %327 = vmatprep.subr.mxu0 0.0
      %328 = vmatpush2.msra.mxu0 0.0
      %329 = vmatprep.subr.mxu0 0.0
      %330 = vmatpush2.msra.mxu0 0.0
      %331 = vmatprep.mubr.f32.mxu0 0.0
      %332 = vmatmul.mubr.f32.gmra.mxu0 %v255
      %v333 = vpop.f32.mrf.mxu0
      %v334 = vadd.f32 %v246, %v333
      %v335 = vpop.f32.mrf.mxu0
      %v336 = vadd.f32 %v246, %v335
      %337 = vmatprep.mubr.f32.mxu0 0.0
      %338 = vmatmul.mubr.f32.gmra.mxu0 %v258
      %v339 = vpop.f32.mrf.mxu0
      %v340 = vadd.f32 %v251, %v339
      %v341 = vpop.f32.mrf.mxu0
      %v342 = vadd.f32 %v251, %v341
      %343 = vdwg.mxu0
      %v344 = vxor.u32 %v334, 2147483648
      %v345 = vxor.u32 %v336, 2147483648
      %v346 = vxor.u32 %v340, 2147483648
      %v347 = vxor.u32 %v342, 2147483648
      %v348 = vmul.f32 %v344, 1.442695
      %v349 = vpow.pop %v348
      %v350 = vmul.f32 %v345, 1.442695
      %v351 = vpow.pop %v350
      %v352 = vmul.f32 %v346, 1.442695
      %v353 = vpow.pop %v352
      %v354 = vmul.f32 %v347, 1.442695
      %v355 = vpow.pop %v354
      %v356 = vadd.f32 %v349, 1.0
      %v357 = vadd.f32 %v351, 1.0
      %v358 = vadd.f32 %v353, 1.0
      %v359 = vadd.f32 %v355, 1.0
      %v360 = vrcp.pop %v356
      %v361 = vmul.f32 1.0, %v360
      %v362 = vrcp.pop %v357
      %v363 = vmul.f32 1.0, %v362
      %v364 = vrcp.pop %v358
      %v365 = vmul.f32 1.0, %v364
      %v366 = vrcp.pop %v359
      %v367 = vmul.f32 1.0, %v366
      %v368 = vmul.f32 %v334, %v361
      %v369 = vmul.f32 %v336, %v363
      %v370 = vmul.f32 %v340, %v365
      %v371 = vmul.f32 %v342, %v367
      %v372 = vld [vmem:[%s13] sm:$0xff]
      %v373 = vld [vmem:[%s13 + $0x8] sm:$0xff]
      %v374 = vld [vmem:[%s14] sm:$0xff]
      %v375 = vld [vmem:[%s14 + $0x8] sm:$0xff]
      %377 = vset.pattern.permute.xlu0 0
      %378 = vperm.xlu0 %377, %v374
      %v379 = vpop.permute.xlu0 %378
      %382 = vset.pattern.permute.xlu0 0
      %383 = vperm.xlu0 %382, %v375
      %v384 = vpop.permute.xlu0 %383
      %v387 = vsel %vm76, %v372, 0
      %v390 = vsel %vm76, %v373, 0
      %392 = vmatprep.subr.mxu0 0.0
      %393 = vmatpush1.msra.mxu0 0.0
      %394 = vmatprep.subr.mxu0 0.0
      %395 = vmatpush1.msra.mxu0 0.0
      %396 = vmatprep.subr.mxu0 0.0
      %397 = vmatpush1.msra.mxu0 0.0
      %398 = vmatprep.subr.mxu0 0.0
      %399 = vmatpush1.msra.mxu0 0.0
      %400 = vmatprep.subr.mxu0 0.0
      %401 = vmatpush1.msra.mxu0 0.0
      %402 = vmatprep.subr.mxu0 0.0
      %403 = vmatpush1.msra.mxu0 0.0
      %404 = vmatprep.subr.mxu0 0.0
      %405 = vmatpush1.msra.mxu0 0.0
      %406 = vmatprep.subr.mxu0 0.0
      %407 = vmatpush1.msra.mxu0 0.0
      %408 = vmatprep.subr.mxu0 0.0
      %409 = vmatpush1.msra.mxu0 0.0
      %410 = vmatprep.subr.mxu0 0.0
      %411 = vmatpush1.msra.mxu0 0.0
      %412 = vmatprep.subr.mxu0 0.0
      %413 = vmatpush1.msra.mxu0 0.0
      %414 = vmatprep.subr.mxu0 0.0
      %415 = vmatpush1.msra.mxu0 0.0
      %416 = vmatprep.subr.mxu0 0.0
      %417 = vmatpush1.msra.mxu0 0.0
      %418 = vmatprep.subr.mxu0 0.0
      %419 = vmatpush1.msra.mxu0 0.0
      %420 = vmatprep.subr.mxu0 %v371
      %421 = vmatpush1.msra.mxu0 %v370
      %422 = vmatprep.subr.mxu0 %v369
      %423 = vmatpush1.msra.mxu0 %v368
      %424 = vmatprep.subr.mxu0 0.0
      %425 = vmatpush2.msra.mxu0 0.0
      %426 = vmatprep.subr.mxu0 0.0
      %427 = vmatpush2.msra.mxu0 0.0
      %428 = vmatprep.subr.mxu0 0.0
      %429 = vmatpush2.msra.mxu0 0.0
      %430 = vmatprep.subr.mxu0 0.0
      %431 = vmatpush2.msra.mxu0 0.0
      %432 = vmatprep.subr.mxu0 0.0
      %433 = vmatpush2.msra.mxu0 0.0
      %434 = vmatprep.subr.mxu0 0.0
      %435 = vmatpush2.msra.mxu0 0.0
      %436 = vmatprep.subr.mxu0 0.0
      %437 = vmatpush2.msra.mxu0 0.0
      %438 = vmatprep.subr.mxu0 0.0
      %439 = vmatpush2.msra.mxu0 0.0
      %440 = vmatprep.subr.mxu0 0.0
      %441 = vmatpush2.msra.mxu0 0.0
      %442 = vmatprep.subr.mxu0 0.0
      %443 = vmatpush2.msra.mxu0 0.0
      %444 = vmatprep.subr.mxu0 0.0
      %445 = vmatpush2.msra.mxu0 0.0
      %446 = vmatprep.subr.mxu0 0.0
      %447 = vmatpush2.msra.mxu0 0.0
      %448 = vmatprep.subr.mxu0 0.0
      %449 = vmatpush2.msra.mxu0 0.0
      %450 = vmatprep.subr.mxu0 0.0
      %451 = vmatpush2.msra.mxu0 0.0
      %452 = vmatprep.subr.mxu0 0.0
      %453 = vmatpush2.msra.mxu0 0.0
      %454 = vmatprep.subr.mxu0 0.0
      %455 = vmatpush2.msra.mxu0 0.0
      %456 = vmatprep.mubr.f32.mxu0 0.0
      %457 = vmatmul.mubr.f32.gmra.mxu0 %v387
      %v458 = vpop.f32.mrf.mxu0
      %v459 = vadd.f32 %v379, %v458
      %v460 = vpop.f32.mrf.mxu0
      %v461 = vadd.f32 %v379, %v460
      %462 = vmatprep.mubr.f32.mxu0 0.0
      %463 = vmatmul.mubr.f32.gmra.mxu0 %v390
      %v464 = vpop.f32.mrf.mxu0
      %v465 = vadd.f32 %v384, %v464
      %v466 = vpop.f32.mrf.mxu0
      %v467 = vadd.f32 %v384, %v466
      %468 = vdwg.mxu0
      %v469 = vxor.u32 %v459, 2147483648
      %v470 = vxor.u32 %v461, 2147483648
      %v471 = vxor.u32 %v465, 2147483648
      %v472 = vxor.u32 %v467, 2147483648
      %v473 = vmul.f32 %v469, 1.442695
      %v474 = vpow.pop %v473
      %v475 = vmul.f32 %v470, 1.442695
      %v476 = vpow.pop %v475
      %v477 = vmul.f32 %v471, 1.442695
      %v478 = vpow.pop %v477
      %v479 = vmul.f32 %v472, 1.442695
      %v480 = vpow.pop %v479
      %v481 = vadd.f32 %v474, 1.0
      %v482 = vadd.f32 %v476, 1.0
      %v483 = vadd.f32 %v478, 1.0
      %v484 = vadd.f32 %v480, 1.0
      %v485 = vrcp.pop %v481
      %v486 = vmul.f32 1.0, %v485
      %v487 = vrcp.pop %v482
      %v488 = vmul.f32 1.0, %v487
      %v489 = vrcp.pop %v483
      %v490 = vmul.f32 1.0, %v489
      %v491 = vrcp.pop %v484
      %v492 = vmul.f32 1.0, %v491
      %v493 = vmul.f32 %v459, %v486
      %v494 = vmul.f32 %v461, %v488
      %v495 = vmul.f32 %v465, %v490
      %v496 = vmul.f32 %v467, %v492
      %v497 = vld [vmem:[%s15] sm:$0xff]
      %v498 = vld [vmem:[%s15 + $0x8] sm:$0xff]
      %v499 = vld [vmem:[%s15 + $0x10] sm:$0xff]
      %v500 = vld [vmem:[%s15 + $0x18] sm:$0xff]
      %v501 = vld [vmem:[%s15 + $0x20] sm:$0xff]
      %v502 = vld [vmem:[%s15 + $0x28] sm:$0xff]
      %v503 = vld [vmem:[%s15 + $0x30] sm:$0xff]
      %v504 = vld [vmem:[%s15 + $0x38] sm:$0xff]
      %v506 = vsel %vm76, %v497, 0
      %v509 = vsel %vm76, %v498, 0
      %v512 = vsel %vm76, %v499, 0
      %v515 = vsel %vm76, %v500, 0
      %v518 = vsel %vm76, %v501, 0
      %v521 = vsel %vm76, %v502, 0
      %v524 = vsel %vm76, %v503, 0
      %v527 = vsel %vm76, %v504, 0
      %529 = vmatprep.subr.mxu0 0.0
      %530 = vmatpush1.msra.mxu0 0.0
      %531 = vmatprep.subr.mxu0 0.0
      %532 = vmatpush1.msra.mxu0 0.0
      %533 = vmatprep.subr.mxu0 0.0
      %534 = vmatpush1.msra.mxu0 0.0
      %535 = vmatprep.subr.mxu0 0.0
      %536 = vmatpush1.msra.mxu0 0.0
      %537 = vmatprep.subr.mxu0 0.0
      %538 = vmatpush1.msra.mxu0 0.0
      %539 = vmatprep.subr.mxu0 0.0
      %540 = vmatpush1.msra.mxu0 0.0
      %541 = vmatprep.subr.mxu0 0.0
      %542 = vmatpush1.msra.mxu0 0.0
      %543 = vmatprep.subr.mxu0 0.0
      %544 = vmatpush1.msra.mxu0 0.0
      %545 = vmatprep.subr.mxu0 0.0
      %546 = vmatpush1.msra.mxu0 0.0
      %547 = vmatprep.subr.mxu0 0.0
      %548 = vmatpush1.msra.mxu0 0.0
      %549 = vmatprep.subr.mxu0 0.0
      %550 = vmatpush1.msra.mxu0 0.0
      %551 = vmatprep.subr.mxu0 0.0
      %552 = vmatpush1.msra.mxu0 0.0
      %553 = vmatprep.subr.mxu0 0.0
      %554 = vmatpush1.msra.mxu0 0.0
      %555 = vmatprep.subr.mxu0 0.0
      %556 = vmatpush1.msra.mxu0 0.0
      %557 = vmatprep.subr.mxu0 %v496
      %558 = vmatpush1.msra.mxu0 %v495
      %559 = vmatprep.subr.mxu0 %v494
      %560 = vmatpush1.msra.mxu0 %v493
      %561 = vmatprep.subr.mxu0 0.0
      %562 = vmatpush2.msra.mxu0 0.0
      %563 = vmatprep.subr.mxu0 0.0
      %564 = vmatpush2.msra.mxu0 0.0
      %565 = vmatprep.subr.mxu0 0.0
      %566 = vmatpush2.msra.mxu0 0.0
      %567 = vmatprep.subr.mxu0 0.0
      %568 = vmatpush2.msra.mxu0 0.0
      %569 = vmatprep.subr.mxu0 0.0
      %570 = vmatpush2.msra.mxu0 0.0
      %571 = vmatprep.subr.mxu0 0.0
      %572 = vmatpush2.msra.mxu0 0.0
      %573 = vmatprep.subr.mxu0 0.0
      %574 = vmatpush2.msra.mxu0 0.0
      %575 = vmatprep.subr.mxu0 0.0
      %576 = vmatpush2.msra.mxu0 0.0
      %577 = vmatprep.subr.mxu0 0.0
      %578 = vmatpush2.msra.mxu0 0.0
      %579 = vmatprep.subr.mxu0 0.0
      %580 = vmatpush2.msra.mxu0 0.0
      %581 = vmatprep.subr.mxu0 0.0
      %582 = vmatpush2.msra.mxu0 0.0
      %583 = vmatprep.subr.mxu0 0.0
      %584 = vmatpush2.msra.mxu0 0.0
      %585 = vmatprep.subr.mxu0 0.0
      %586 = vmatpush2.msra.mxu0 0.0
      %587 = vmatprep.subr.mxu0 0.0
      %588 = vmatpush2.msra.mxu0 0.0
      %589 = vmatprep.subr.mxu0 0.0
      %590 = vmatpush2.msra.mxu0 0.0
      %591 = vmatprep.subr.mxu0 0.0
      %592 = vmatpush2.msra.mxu0 0.0
      %593 = vmatprep.mubr.f32.mxu0 0.0
      %594 = vmatmul.mubr.f32.gmra.mxu0 %v506
      %v595 = vpop.f32.mrf.mxu0
      %v596 = vadd.f32 0.0, %v595
      %v597 = vpop.f32.mrf.mxu0
      %v598 = vadd.f32 0.0, %v597
      %599 = vmatprep.mubr.f32.mxu0 0.0
      %600 = vmatmul.mubr.f32.gmra.mxu0 %v509
      %v601 = vpop.f32.mrf.mxu0
      %v602 = vadd.f32 0.0, %v601
      %v603 = vpop.f32.mrf.mxu0
      %v604 = vadd.f32 0.0, %v603
      %605 = vmatprep.mubr.f32.mxu0 0.0
      %606 = vmatmul.mubr.f32.gmra.mxu0 %v512
      %v607 = vpop.f32.mrf.mxu0
      %v608 = vadd.f32 0.0, %v607
      %v609 = vpop.f32.mrf.mxu0
      %v610 = vadd.f32 0.0, %v609
      %611 = vmatprep.mubr.f32.mxu0 0.0
      %612 = vmatmul.mubr.f32.gmra.mxu0 %v515
      %v613 = vpop.f32.mrf.mxu0
      %v614 = vadd.f32 0.0, %v613
      %v615 = vpop.f32.mrf.mxu0
      %v616 = vadd.f32 0.0, %v615
      %617 = vmatprep.mubr.f32.mxu0 0.0
      %618 = vmatmul.mubr.f32.gmra.mxu0 %v518
      %v619 = vpop.f32.mrf.mxu0
      %v620 = vadd.f32 0.0, %v619
      %v621 = vpop.f32.mrf.mxu0
      %v622 = vadd.f32 0.0, %v621
      %623 = vmatprep.mubr.f32.mxu0 0.0
      %624 = vmatmul.mubr.f32.gmra.mxu0 %v521
      %v625 = vpop.f32.mrf.mxu0
      %v626 = vadd.f32 0.0, %v625
      %v627 = vpop.f32.mrf.mxu0
      %v628 = vadd.f32 0.0, %v627
      %629 = vmatprep.mubr.f32.mxu0 0.0
      %630 = vmatmul.mubr.f32.gmra.mxu0 %v524
      %v631 = vpop.f32.mrf.mxu0
      %v632 = vadd.f32 0.0, %v631
      %v633 = vpop.f32.mrf.mxu0
      %v634 = vadd.f32 0.0, %v633
      %635 = vmatprep.mubr.f32.mxu0 0.0
      %636 = vmatmul.mubr.f32.gmra.mxu0 %v527
      %v637 = vpop.f32.mrf.mxu0
      %v638 = vadd.f32 0.0, %v637
      %v639 = vpop.f32.mrf.mxu0
      %v640 = vadd.f32 0.0, %v639
      %641 = vdwg.mxu0
      %v642 = vld [vmem:[%s5] sm:$0xff]
      %v643 = vld [vmem:[%s5 + $0x8] sm:$0xff]
      %v644 = vld [vmem:[%s5 + $0x10] sm:$0xff]
      %v645 = vld [vmem:[%s5 + $0x18] sm:$0xff]
      %v646 = vld [vmem:[%s5 + $0x20] sm:$0xff]
      %v647 = vld [vmem:[%s5 + $0x28] sm:$0xff]
      %v648 = vld [vmem:[%s5 + $0x30] sm:$0xff]
      %v649 = vld [vmem:[%s5 + $0x38] sm:$0xff]
      %v650 = vld [vmem:[%s5 + $0x40] sm:$0xff]
      %v651 = vld [vmem:[%s5 + $0x48] sm:$0xff]
      %v652 = vld [vmem:[%s5 + $0x50] sm:$0xff]
      %v653 = vld [vmem:[%s5 + $0x58] sm:$0xff]
      %v654 = vld [vmem:[%s5 + $0x60] sm:$0xff]
      %v655 = vld [vmem:[%s5 + $0x68] sm:$0xff]
      %v656 = vld [vmem:[%s5 + $0x70] sm:$0xff]
      %v657 = vld [vmem:[%s5 + $0x78] sm:$0xff]
      %v658 = vmul.f32 %v596, %v642
      %v659 = vmul.f32 %v598, %v643
      %v660 = vmul.f32 %v602, %v644
      %v661 = vmul.f32 %v604, %v645
      %v662 = vmul.f32 %v608, %v646
      %v663 = vmul.f32 %v610, %v647
      %v664 = vmul.f32 %v614, %v648
      %v665 = vmul.f32 %v616, %v649
      %v666 = vmul.f32 %v620, %v650
      %v667 = vmul.f32 %v622, %v651
      %v668 = vmul.f32 %v626, %v652
      %v669 = vmul.f32 %v628, %v653
      %v670 = vmul.f32 %v632, %v654
      %v671 = vmul.f32 %v634, %v655
      %v672 = vmul.f32 %v638, %v656
      %v673 = vmul.f32 %v640, %v657
      %v674 = vld [vmem:[%s6] sm:$0xff]
      %v675 = vld [vmem:[%s6 + $0x8] sm:$0xff]
      %v676 = vld [vmem:[%s6 + $0x10] sm:$0xff]
      %v677 = vld [vmem:[%s6 + $0x18] sm:$0xff]
      %v678 = vld [vmem:[%s6 + $0x20] sm:$0xff]
      %v679 = vld [vmem:[%s6 + $0x28] sm:$0xff]
      %v680 = vld [vmem:[%s6 + $0x30] sm:$0xff]
      %v681 = vld [vmem:[%s6 + $0x38] sm:$0xff]
      %v682 = vld [vmem:[%s6 + $0x40] sm:$0xff]
      %v683 = vld [vmem:[%s6 + $0x48] sm:$0xff]
      %v684 = vld [vmem:[%s6 + $0x50] sm:$0xff]
      %v685 = vld [vmem:[%s6 + $0x58] sm:$0xff]
      %v686 = vld [vmem:[%s6 + $0x60] sm:$0xff]
      %v687 = vld [vmem:[%s6 + $0x68] sm:$0xff]
      %v688 = vld [vmem:[%s6 + $0x70] sm:$0xff]
      %v689 = vld [vmem:[%s6 + $0x78] sm:$0xff]
      %v690 = vld [vmem:[%s6 + $0x80] sm:$0xff]
      %v691 = vld [vmem:[%s6 + $0x88] sm:$0xff]
      %v692 = vld [vmem:[%s6 + $0x90] sm:$0xff]
      %v693 = vld [vmem:[%s6 + $0x98] sm:$0xff]
      %v694 = vld [vmem:[%s6 + $0xa0] sm:$0xff]
      %v695 = vld [vmem:[%s6 + $0xa8] sm:$0xff]
      %v696 = vld [vmem:[%s6 + $0xb0] sm:$0xff]
      %v697 = vld [vmem:[%s6 + $0xb8] sm:$0xff]
      %v698 = vld [vmem:[%s6 + $0xc0] sm:$0xff]
      %v699 = vld [vmem:[%s6 + $0xc8] sm:$0xff]
      %v700 = vld [vmem:[%s6 + $0xd0] sm:$0xff]
      %v701 = vld [vmem:[%s6 + $0xd8] sm:$0xff]
      %v702 = vld [vmem:[%s6 + $0xe0] sm:$0xff]
      %v703 = vld [vmem:[%s6 + $0xe8] sm:$0xff]
      %v704 = vld [vmem:[%s6 + $0xf0] sm:$0xff]
      %v705 = vld [vmem:[%s6 + $0xf8] sm:$0xff]
      %v706 = vld [vmem:[%s16] sm:$0xff]
      %v707 = vld [vmem:[%s16 + $0x8] sm:$0xff]
      %v708 = vld [vmem:[%s16 + $0x10] sm:$0xff]
      %v709 = vld [vmem:[%s16 + $0x18] sm:$0xff]
      %v710 = vld [vmem:[%s16 + $0x20] sm:$0xff]
      %v711 = vld [vmem:[%s16 + $0x28] sm:$0xff]
      %v712 = vld [vmem:[%s16 + $0x30] sm:$0xff]
      %v713 = vld [vmem:[%s16 + $0x38] sm:$0xff]
      %715 = vset.pattern.permute.xlu0 0
      %716 = vperm.xlu0 %715, %v706
      %v717 = vpop.permute.xlu0 %716
      %720 = vset.pattern.permute.xlu0 0
      %721 = vperm.xlu0 %720, %v707
      %v722 = vpop.permute.xlu0 %721
      %725 = vset.pattern.permute.xlu0 0
      %726 = vperm.xlu0 %725, %v708
      %v727 = vpop.permute.xlu0 %726
      %730 = vset.pattern.permute.xlu0 0
      %731 = vperm.xlu0 %730, %v709
      %v732 = vpop.permute.xlu0 %731
      %735 = vset.pattern.permute.xlu0 0
      %736 = vperm.xlu0 %735, %v710
      %v737 = vpop.permute.xlu0 %736
      %740 = vset.pattern.permute.xlu0 0
      %741 = vperm.xlu0 %740, %v711
      %v742 = vpop.permute.xlu0 %741
      %745 = vset.pattern.permute.xlu0 0
      %746 = vperm.xlu0 %745, %v712
      %v747 = vpop.permute.xlu0 %746
      %750 = vset.pattern.permute.xlu0 0
      %751 = vperm.xlu0 %750, %v713
      %v752 = vpop.permute.xlu0 %751
      %754 = vmatprep.subr.mxu0 0.0
      %755 = vmatpush1.msra.mxu0 %v689
      %756 = vmatprep.subr.mxu0 0.0
      %757 = vmatpush1.msra.mxu0 %v688
      %758 = vmatprep.subr.mxu0 0.0
      %759 = vmatpush1.msra.mxu0 %v687
      %760 = vmatprep.subr.mxu0 0.0
      %761 = vmatpush1.msra.mxu0 %v686
      %762 = vmatprep.subr.mxu0 0.0
      %763 = vmatpush1.msra.mxu0 %v685
      %764 = vmatprep.subr.mxu0 0.0
      %765 = vmatpush1.msra.mxu0 %v684
      %766 = vmatprep.subr.mxu0 0.0
      %767 = vmatpush1.msra.mxu0 %v683
      %768 = vmatprep.subr.mxu0 0.0
      %769 = vmatpush1.msra.mxu0 %v682
      %770 = vmatprep.subr.mxu0 0.0
      %771 = vmatpush1.msra.mxu0 %v681
      %772 = vmatprep.subr.mxu0 0.0
      %773 = vmatpush1.msra.mxu0 %v680
      %774 = vmatprep.subr.mxu0 0.0
      %775 = vmatpush1.msra.mxu0 %v679
      %776 = vmatprep.subr.mxu0 0.0
      %777 = vmatpush1.msra.mxu0 %v678
      %778 = vmatprep.subr.mxu0 0.0
      %779 = vmatpush1.msra.mxu0 %v677
      %780 = vmatprep.subr.mxu0 0.0
      %781 = vmatpush1.msra.mxu0 %v676
      %782 = vmatprep.subr.mxu0 0.0
      %783 = vmatpush1.msra.mxu0 %v675
      %784 = vmatprep.subr.mxu0 0.0
      %785 = vmatpush1.msra.mxu0 %v674
      %786 = vmatprep.subr.mxu0 0.0
      %787 = vmatpush2.msra.mxu0 %v705
      %788 = vmatprep.subr.mxu0 0.0
      %789 = vmatpush2.msra.mxu0 %v704
      %790 = vmatprep.subr.mxu0 0.0
      %791 = vmatpush2.msra.mxu0 %v703
      %792 = vmatprep.subr.mxu0 0.0
      %793 = vmatpush2.msra.mxu0 %v702
      %794 = vmatprep.subr.mxu0 0.0
      %795 = vmatpush2.msra.mxu0 %v701
      %796 = vmatprep.subr.mxu0 0.0
      %797 = vmatpush2.msra.mxu0 %v700
      %798 = vmatprep.subr.mxu0 0.0
      %799 = vmatpush2.msra.mxu0 %v699
      %800 = vmatprep.subr.mxu0 0.0
      %801 = vmatpush2.msra.mxu0 %v698
      %802 = vmatprep.subr.mxu0 0.0
      %803 = vmatpush2.msra.mxu0 %v697
      %804 = vmatprep.subr.mxu0 0.0
      %805 = vmatpush2.msra.mxu0 %v696
      %806 = vmatprep.subr.mxu0 0.0
      %807 = vmatpush2.msra.mxu0 %v695
      %808 = vmatprep.subr.mxu0 0.0
      %809 = vmatpush2.msra.mxu0 %v694
      %810 = vmatprep.subr.mxu0 0.0
      %811 = vmatpush2.msra.mxu0 %v693
      %812 = vmatprep.subr.mxu0 0.0
      %813 = vmatpush2.msra.mxu0 %v692
      %814 = vmatprep.subr.mxu0 0.0
      %815 = vmatpush2.msra.mxu0 %v691
      %816 = vmatprep.subr.mxu0 0.0
      %817 = vmatpush2.msra.mxu0 %v690
      %818 = vmatprep.mubr.f32.mxu0 %v659
      %819 = vmatmul.mubr.f32.gmra.mxu0 %v658
      %v820 = vpop.f32.mrf.mxu0
      %v821 = vadd.f32 %v717, %v820
      %v822 = vpop.f32.mrf.mxu0
      %823 = vmatprep.mubr.f32.mxu0 %v661
      %824 = vmatmul.mubr.f32.gmra.mxu0 %v660
      %v825 = vpop.f32.mrf.mxu0
      %v826 = vadd.f32 %v722, %v825
      %v827 = vpop.f32.mrf.mxu0
      %828 = vmatprep.mubr.f32.mxu0 %v663
      %829 = vmatmul.mubr.f32.gmra.mxu0 %v662
      %v830 = vpop.f32.mrf.mxu0
      %v831 = vadd.f32 %v727, %v830
      %v832 = vpop.f32.mrf.mxu0
      %833 = vmatprep.mubr.f32.mxu0 %v665
      %834 = vmatmul.mubr.f32.gmra.mxu0 %v664
      %v835 = vpop.f32.mrf.mxu0
      %v836 = vadd.f32 %v732, %v835
      %v837 = vpop.f32.mrf.mxu0
      %838 = vmatprep.mubr.f32.mxu0 %v667
      %839 = vmatmul.mubr.f32.gmra.mxu0 %v666
      %v840 = vpop.f32.mrf.mxu0
      %v841 = vadd.f32 %v737, %v840
      %v842 = vpop.f32.mrf.mxu0
      %843 = vmatprep.mubr.f32.mxu0 %v669
      %844 = vmatmul.mubr.f32.gmra.mxu0 %v668
      %v845 = vpop.f32.mrf.mxu0
      %v846 = vadd.f32 %v742, %v845
      %v847 = vpop.f32.mrf.mxu0
      %848 = vmatprep.mubr.f32.mxu0 %v671
      %849 = vmatmul.mubr.f32.gmra.mxu0 %v670
      %v850 = vpop.f32.mrf.mxu0
      %v851 = vadd.f32 %v747, %v850
      %v852 = vpop.f32.mrf.mxu0
      %853 = vmatprep.mubr.f32.mxu0 %v673
      %854 = vmatmul.mubr.f32.gmra.mxu0 %v672
      %v855 = vpop.f32.mrf.mxu0
      %v856 = vadd.f32 %v752, %v855
      %v857 = vpop.f32.mrf.mxu0
      %858 = vdwg.mxu0
      %s859 = smul.u32 %s64, 64
      %s860 = scalar_lea.vmem %s1, %s859
      %v861 = vld [vmem:[%s860] sm:$0xff]
      %v862 = vld [vmem:[%s860 + $0x8] sm:$0xff]
      %v863 = vld [vmem:[%s860 + $0x10] sm:$0xff]
      %v864 = vld [vmem:[%s860 + $0x18] sm:$0xff]
      %v865 = vld [vmem:[%s860 + $0x20] sm:$0xff]
      %v866 = vld [vmem:[%s860 + $0x28] sm:$0xff]
      %v867 = vld [vmem:[%s860 + $0x30] sm:$0xff]
      %v868 = vld [vmem:[%s860 + $0x38] sm:$0xff]
      %s869 = smul.u32 %s64, 32
      %s870 = scalar_lea.vmem %s2, %s869
      %v871 = vld [vmem:[%s870] sm:$0xff]
      %v872 = vld [vmem:[%s870 + $0x8] sm:$0xff]
      %v873 = vld [vmem:[%s870 + $0x10] sm:$0xff]
      %v874 = vld [vmem:[%s870 + $0x18] sm:$0xff]
      %vm875 = vcmask 261120
      %v877 = vsel %vm875, %v861, 0
      %v880 = vsel %vm875, %v862, 0
      %v883 = vsel %vm875, %v863, 0
      %v886 = vsel %vm875, %v864, 0
      %v889 = vsel %vm875, %v865, 0
      %v892 = vsel %vm875, %v866, 0
      %v895 = vsel %vm875, %v867, 0
      %v898 = vsel %vm875, %v868, 0
      %900 = vmatprep.subr.mxu0 0.0
      %901 = vmatpush1.msra.mxu0 0.0
      %902 = vmatprep.subr.mxu0 0.0
      %903 = vmatpush1.msra.mxu0 0.0
      %904 = vmatprep.subr.mxu0 0.0
      %905 = vmatpush1.msra.mxu0 0.0
      %906 = vmatprep.subr.mxu0 0.0
      %907 = vmatpush1.msra.mxu0 0.0
      %908 = vmatprep.subr.mxu0 0.0
      %909 = vmatpush1.msra.mxu0 0.0
      %910 = vmatprep.subr.mxu0 0.0
      %911 = vmatpush1.msra.mxu0 0.0
      %912 = vmatprep.subr.mxu0 0.0
      %913 = vmatpush1.msra.mxu0 0.0
      %914 = vmatprep.subr.mxu0 0.0
      %915 = vmatpush1.msra.mxu0 0.0
      %916 = vmatprep.subr.mxu0 0.0
      %917 = vmatpush1.msra.mxu0 0.0
      %918 = vmatprep.subr.mxu0 0.0
      %919 = vmatpush1.msra.mxu0 0.0
      %920 = vmatprep.subr.mxu0 0.0
      %921 = vmatpush1.msra.mxu0 0.0
      %922 = vmatprep.subr.mxu0 0.0
      %923 = vmatpush1.msra.mxu0 0.0
      %924 = vmatprep.subr.mxu0 0.0
      %925 = vmatpush1.msra.mxu0 %v874
      %926 = vmatprep.subr.mxu0 0.0
      %927 = vmatpush1.msra.mxu0 %v873
      %928 = vmatprep.subr.mxu0 0.0
      %929 = vmatpush1.msra.mxu0 %v872
      %930 = vmatprep.subr.mxu0 0.0
      %931 = vmatpush1.msra.mxu0 %v871
      %932 = vmatprep.subr.mxu0 0.0
      %933 = vmatpush2.msra.mxu0 0.0
      %934 = vmatprep.subr.mxu0 0.0
      %935 = vmatpush2.msra.mxu0 0.0
      %936 = vmatprep.subr.mxu0 0.0
      %937 = vmatpush2.msra.mxu0 0.0
      %938 = vmatprep.subr.mxu0 0.0
      %939 = vmatpush2.msra.mxu0 0.0
      %940 = vmatprep.subr.mxu0 0.0
      %941 = vmatpush2.msra.mxu0 0.0
      %942 = vmatprep.subr.mxu0 0.0
      %943 = vmatpush2.msra.mxu0 0.0
      %944 = vmatprep.subr.mxu0 0.0
      %945 = vmatpush2.msra.mxu0 0.0
      %946 = vmatprep.subr.mxu0 0.0
      %947 = vmatpush2.msra.mxu0 0.0
      %948 = vmatprep.subr.mxu0 0.0
      %949 = vmatpush2.msra.mxu0 0.0
      %950 = vmatprep.subr.mxu0 0.0
      %951 = vmatpush2.msra.mxu0 0.0
      %952 = vmatprep.subr.mxu0 0.0
      %953 = vmatpush2.msra.mxu0 0.0
      %954 = vmatprep.subr.mxu0 0.0
      %955 = vmatpush2.msra.mxu0 0.0
      %956 = vmatprep.subr.mxu0 0.0
      %957 = vmatpush2.msra.mxu0 0.0
      %958 = vmatprep.subr.mxu0 0.0
      %959 = vmatpush2.msra.mxu0 0.0
      %960 = vmatprep.subr.mxu0 0.0
      %961 = vmatpush2.msra.mxu0 0.0
      %962 = vmatprep.subr.mxu0 0.0
      %963 = vmatpush2.msra.mxu0 0.0
      %964 = vmatprep.mubr.f32.mxu0 0.0
      %965 = vmatmul.mubr.f32.gmra.mxu0 %v877
      %v966 = vpop.f32.mrf.mxu0
      %v967 = vadd.f32 %v821, %v966
      %v968 = vpop.f32.mrf.mxu0
      %969 = vmatprep.mubr.f32.mxu0 0.0
      %970 = vmatmul.mubr.f32.gmra.mxu0 %v880
      %v971 = vpop.f32.mrf.mxu0
      %v972 = vadd.f32 %v826, %v971
      %v973 = vpop.f32.mrf.mxu0
      %974 = vmatprep.mubr.f32.mxu0 0.0
      %975 = vmatmul.mubr.f32.gmra.mxu0 %v883
      %v976 = vpop.f32.mrf.mxu0
      %v977 = vadd.f32 %v831, %v976
      %v978 = vpop.f32.mrf.mxu0
      %979 = vmatprep.mubr.f32.mxu0 0.0
      %980 = vmatmul.mubr.f32.gmra.mxu0 %v886
      %v981 = vpop.f32.mrf.mxu0
      %v982 = vadd.f32 %v836, %v981
      %v983 = vpop.f32.mrf.mxu0
      %984 = vmatprep.mubr.f32.mxu0 0.0
      %985 = vmatmul.mubr.f32.gmra.mxu0 %v889
      %v986 = vpop.f32.mrf.mxu0
      %v987 = vadd.f32 %v841, %v986
      %v988 = vpop.f32.mrf.mxu0
      %989 = vmatprep.mubr.f32.mxu0 0.0
      %990 = vmatmul.mubr.f32.gmra.mxu0 %v892
      %v991 = vpop.f32.mrf.mxu0
      %v992 = vadd.f32 %v846, %v991
      %v993 = vpop.f32.mrf.mxu0
      %994 = vmatprep.mubr.f32.mxu0 0.0
      %995 = vmatmul.mubr.f32.gmra.mxu0 %v895
      %v996 = vpop.f32.mrf.mxu0
      %v997 = vadd.f32 %v851, %v996
      %v998 = vpop.f32.mrf.mxu0
      %999 = vmatprep.mubr.f32.mxu0 0.0
      %1000 = vmatmul.mubr.f32.gmra.mxu0 %v898
      %v1001 = vpop.f32.mrf.mxu0
      %v1002 = vadd.f32 %v856, %v1001
      %v1003 = vpop.f32.mrf.mxu0
      %1004 = vdwg.mxu0
      %vm1005 = vcmask 392192
      %v1006 = vsel %vm1005, %v967, -inf
      %1007 = vmax.xlane.f32.xlu0 %v1006
      %v1008 = vpop.xlane.xlu0 %1007
      %v1009 = vsel %vm1005, %v972, -inf
      %1010 = vmax.xlane.f32.xlu0 %v1009
      %v1011 = vpop.xlane.xlu0 %1010
      %v1012 = vsel %vm1005, %v977, -inf
      %1013 = vmax.xlane.f32.xlu0 %v1012
      %v1014 = vpop.xlane.xlu0 %1013
      %v1015 = vsel %vm1005, %v982, -inf
      %1016 = vmax.xlane.f32.xlu0 %v1015
      %v1017 = vpop.xlane.xlu0 %1016
      %v1018 = vsel %vm1005, %v987, -inf
      %1019 = vmax.xlane.f32.xlu0 %v1018
      %v1020 = vpop.xlane.xlu0 %1019
      %v1021 = vsel %vm1005, %v992, -inf
      %1022 = vmax.xlane.f32.xlu0 %v1021
      %v1023 = vpop.xlane.xlu0 %1022
      %v1024 = vsel %vm1005, %v997, -inf
      %1025 = vmax.xlane.f32.xlu0 %v1024
      %v1026 = vpop.xlane.xlu0 %1025
      %v1027 = vsel %vm1005, %v1002, -inf
      %1028 = vmax.xlane.f32.xlu0 %v1027
      %v1029 = vpop.xlane.xlu0 %1028
      %v1030 = vsub.f32 %v967, %v1008
      %v1031 = vsub.f32 %v972, %v1011
      %v1032 = vsub.f32 %v977, %v1014
      %v1033 = vsub.f32 %v982, %v1017
      %v1034 = vsub.f32 %v987, %v1020
      %v1035 = vsub.f32 %v992, %v1023
      %v1036 = vsub.f32 %v997, %v1026
      %v1037 = vsub.f32 %v1002, %v1029
      %v1038 = vmul.f32 %v1030, 1.442695
      %v1039 = vpow.pop %v1038
      %v1040 = vmul.f32 %v1031, 1.442695
      %v1041 = vpow.pop %v1040
      %v1042 = vmul.f32 %v1032, 1.442695
      %v1043 = vpow.pop %v1042
      %v1044 = vmul.f32 %v1033, 1.442695
      %v1045 = vpow.pop %v1044
      %v1046 = vmul.f32 %v1034, 1.442695
      %v1047 = vpow.pop %v1046
      %v1048 = vmul.f32 %v1035, 1.442695
      %v1049 = vpow.pop %v1048
      %v1050 = vmul.f32 %v1036, 1.442695
      %v1051 = vpow.pop %v1050
      %v1052 = vmul.f32 %v1037, 1.442695
      %v1053 = vpow.pop %v1052
      %v1054 = vld [vmem:[%s7] sm:$0xff]
      %v1055 = vld [vmem:[%s7 + $0x8] sm:$0xff]
      %v1056 = vld [vmem:[%s7 + $0x10] sm:$0xff]
      %v1057 = vld [vmem:[%s7 + $0x18] sm:$0xff]
      %v1058 = vld [vmem:[%s7 + $0x20] sm:$0xff]
      %v1059 = vld [vmem:[%s7 + $0x28] sm:$0xff]
      %v1061 = vsel %vm1005, %v1039, 0
      %v1064 = vsel %vm1005, %v1041, 0
      %v1067 = vsel %vm1005, %v1043, 0
      %v1070 = vsel %vm1005, %v1045, 0
      %v1073 = vsel %vm1005, %v1047, 0
      %v1076 = vsel %vm1005, %v1049, 0
      %v1079 = vsel %vm1005, %v1051, 0
      %v1082 = vsel %vm1005, %v1053, 0
      %1084 = vmatprep.subr.mxu0 0.0
      %1085 = vmatpush1.msra.mxu0 0.0
      %1086 = vmatprep.subr.mxu0 0.0
      %1087 = vmatpush1.msra.mxu0 0.0
      %1088 = vmatprep.subr.mxu0 0.0
      %1089 = vmatpush1.msra.mxu0 0.0
      %1090 = vmatprep.subr.mxu0 0.0
      %1091 = vmatpush1.msra.mxu0 0.0
      %1092 = vmatprep.subr.mxu0 0.0
      %1093 = vmatpush1.msra.mxu0 0.0
      %1094 = vmatprep.subr.mxu0 0.0
      %1095 = vmatpush1.msra.mxu0 0.0
      %1096 = vmatprep.subr.mxu0 0.0
      %1097 = vmatpush1.msra.mxu0 0.0
      %1098 = vmatprep.subr.mxu0 0.0
      %1099 = vmatpush1.msra.mxu0 0.0
      %1100 = vmatprep.subr.mxu0 0.0
      %1101 = vmatpush1.msra.mxu0 0.0
      %1102 = vmatprep.subr.mxu0 0.0
      %1103 = vmatpush1.msra.mxu0 0.0
      %1104 = vmatprep.subr.mxu0 0.0
      %1105 = vmatpush1.msra.mxu0 %v1059
      %1106 = vmatprep.subr.mxu0 0.0
      %1107 = vmatpush1.msra.mxu0 %v1058
      %1108 = vmatprep.subr.mxu0 0.0
      %1109 = vmatpush1.msra.mxu0 %v1057
      %1110 = vmatprep.subr.mxu0 0.0
      %1111 = vmatpush1.msra.mxu0 %v1056
      %1112 = vmatprep.subr.mxu0 0.0
      %1113 = vmatpush1.msra.mxu0 %v1055
      %1114 = vmatprep.subr.mxu0 0.0
      %1115 = vmatpush1.msra.mxu0 %v1054
      %1116 = vmatprep.subr.mxu0 0.0
      %1117 = vmatpush2.msra.mxu0 0.0
      %1118 = vmatprep.subr.mxu0 0.0
      %1119 = vmatpush2.msra.mxu0 0.0
      %1120 = vmatprep.subr.mxu0 0.0
      %1121 = vmatpush2.msra.mxu0 0.0
      %1122 = vmatprep.subr.mxu0 0.0
      %1123 = vmatpush2.msra.mxu0 0.0
      %1124 = vmatprep.subr.mxu0 0.0
      %1125 = vmatpush2.msra.mxu0 0.0
      %1126 = vmatprep.subr.mxu0 0.0
      %1127 = vmatpush2.msra.mxu0 0.0
      %1128 = vmatprep.subr.mxu0 0.0
      %1129 = vmatpush2.msra.mxu0 0.0
      %1130 = vmatprep.subr.mxu0 0.0
      %1131 = vmatpush2.msra.mxu0 0.0
      %1132 = vmatprep.subr.mxu0 0.0
      %1133 = vmatpush2.msra.mxu0 0.0
      %1134 = vmatprep.subr.mxu0 0.0
      %1135 = vmatpush2.msra.mxu0 0.0
      %1136 = vmatprep.subr.mxu0 0.0
      %1137 = vmatpush2.msra.mxu0 0.0
      %1138 = vmatprep.subr.mxu0 0.0
      %1139 = vmatpush2.msra.mxu0 0.0
      %1140 = vmatprep.subr.mxu0 0.0
      %1141 = vmatpush2.msra.mxu0 0.0
      %1142 = vmatprep.subr.mxu0 0.0
      %1143 = vmatpush2.msra.mxu0 0.0
      %1144 = vmatprep.subr.mxu0 0.0
      %1145 = vmatpush2.msra.mxu0 0.0
      %1146 = vmatprep.subr.mxu0 0.0
      %1147 = vmatpush2.msra.mxu0 0.0
      %1148 = vmatprep.mubr.f32.mxu0 0.0
      %1149 = vmatmul.mubr.f32.gmra.mxu0 %v1061
      %v1150 = vpop.f32.mrf.mxu0
      %v1151 = vadd.f32 0.0, %v1150
      %v1152 = vpop.f32.mrf.mxu0
      %1153 = vmatprep.mubr.f32.mxu0 0.0
      %1154 = vmatmul.mubr.f32.gmra.mxu0 %v1064
      %v1155 = vpop.f32.mrf.mxu0
      %v1156 = vadd.f32 0.0, %v1155
      %v1157 = vpop.f32.mrf.mxu0
      %1158 = vmatprep.mubr.f32.mxu0 0.0
      %1159 = vmatmul.mubr.f32.gmra.mxu0 %v1067
      %v1160 = vpop.f32.mrf.mxu0
      %v1161 = vadd.f32 0.0, %v1160
      %v1162 = vpop.f32.mrf.mxu0
      %1163 = vmatprep.mubr.f32.mxu0 0.0
      %1164 = vmatmul.mubr.f32.gmra.mxu0 %v1070
      %v1165 = vpop.f32.mrf.mxu0
      %v1166 = vadd.f32 0.0, %v1165
      %v1167 = vpop.f32.mrf.mxu0
      %1168 = vmatprep.mubr.f32.mxu0 0.0
      %1169 = vmatmul.mubr.f32.gmra.mxu0 %v1073
      %v1170 = vpop.f32.mrf.mxu0
      %v1171 = vadd.f32 0.0, %v1170
      %v1172 = vpop.f32.mrf.mxu0
      %1173 = vmatprep.mubr.f32.mxu0 0.0
      %1174 = vmatmul.mubr.f32.gmra.mxu0 %v1076
      %v1175 = vpop.f32.mrf.mxu0
      %v1176 = vadd.f32 0.0, %v1175
      %v1177 = vpop.f32.mrf.mxu0
      %1178 = vmatprep.mubr.f32.mxu0 0.0
      %1179 = vmatmul.mubr.f32.gmra.mxu0 %v1079
      %v1180 = vpop.f32.mrf.mxu0
      %v1181 = vadd.f32 0.0, %v1180
      %v1182 = vpop.f32.mrf.mxu0
      %1183 = vmatprep.mubr.f32.mxu0 0.0
      %1184 = vmatmul.mubr.f32.gmra.mxu0 %v1082
      %v1185 = vpop.f32.mrf.mxu0
      %v1186 = vadd.f32 0.0, %v1185
      %v1187 = vpop.f32.mrf.mxu0
      %1188 = vdwg.mxu0
      %v1189 = vrcp.pop %v1151
      %v1190 = vrcp.pop %v1156
      %v1191 = vrcp.pop %v1161
      %v1192 = vrcp.pop %v1166
      %v1193 = vrcp.pop %v1171
      %v1194 = vrcp.pop %v1176
      %v1195 = vrcp.pop %v1181
      %v1196 = vrcp.pop %v1186
      %v1197 = vld [vmem:[%s8] sm:$0x7]
      %v1199 = vsel %vm253, %v1189, 0
      %v1202 = vsel %vm253, %v1190, 0
      %v1205 = vsel %vm253, %v1191, 0
      %v1208 = vsel %vm253, %v1192, 0
      %v1211 = vsel %vm253, %v1193, 0
      %v1214 = vsel %vm253, %v1194, 0
      %v1217 = vsel %vm253, %v1195, 0
      %v1220 = vsel %vm253, %v1196, 0
      %v1223 = vsel %vm260, %v1197, 0
      %1225 = vmatprep.subr.mxu0 0.0
      %1226 = vmatpush1.msra.mxu0 0.0
      %1227 = vmatprep.subr.mxu0 0.0
      %1228 = vmatpush1.msra.mxu0 0.0
      %1229 = vmatprep.subr.mxu0 0.0
      %1230 = vmatpush1.msra.mxu0 0.0
      %1231 = vmatprep.subr.mxu0 0.0
      %1232 = vmatpush1.msra.mxu0 0.0
      %1233 = vmatprep.subr.mxu0 0.0
      %1234 = vmatpush1.msra.mxu0 0.0
      %1235 = vmatprep.subr.mxu0 0.0
      %1236 = vmatpush1.msra.mxu0 0.0
      %1237 = vmatprep.subr.mxu0 0.0
      %1238 = vmatpush1.msra.mxu0 0.0
      %1239 = vmatprep.subr.mxu0 0.0
      %1240 = vmatpush1.msra.mxu0 0.0
      %1241 = vmatprep.subr.mxu0 0.0
      %1242 = vmatpush1.msra.mxu0 0.0
      %1243 = vmatprep.subr.mxu0 0.0
      %1244 = vmatpush1.msra.mxu0 0.0
      %1245 = vmatprep.subr.mxu0 0.0
      %1246 = vmatpush1.msra.mxu0 0.0
      %1247 = vmatprep.subr.mxu0 0.0
      %1248 = vmatpush1.msra.mxu0 0.0
      %1249 = vmatprep.subr.mxu0 0.0
      %1250 = vmatpush1.msra.mxu0 0.0
      %1251 = vmatprep.subr.mxu0 0.0
      %1252 = vmatpush1.msra.mxu0 0.0
      %1253 = vmatprep.subr.mxu0 0.0
      %1254 = vmatpush1.msra.mxu0 0.0
      %1255 = vmatprep.subr.mxu0 0.0
      %1256 = vmatpush1.msra.mxu0 %v1223
      %1257 = vmatprep.subr.mxu0 0.0
      %1258 = vmatpush2.msra.mxu0 0.0
      %1259 = vmatprep.subr.mxu0 0.0
      %1260 = vmatpush2.msra.mxu0 0.0
      %1261 = vmatprep.subr.mxu0 0.0
      %1262 = vmatpush2.msra.mxu0 0.0
      %1263 = vmatprep.subr.mxu0 0.0
      %1264 = vmatpush2.msra.mxu0 0.0
      %1265 = vmatprep.subr.mxu0 0.0
      %1266 = vmatpush2.msra.mxu0 0.0
      %1267 = vmatprep.subr.mxu0 0.0
      %1268 = vmatpush2.msra.mxu0 0.0
      %1269 = vmatprep.subr.mxu0 0.0
      %1270 = vmatpush2.msra.mxu0 0.0
      %1271 = vmatprep.subr.mxu0 0.0
      %1272 = vmatpush2.msra.mxu0 0.0
      %1273 = vmatprep.subr.mxu0 0.0
      %1274 = vmatpush2.msra.mxu0 0.0
      %1275 = vmatprep.subr.mxu0 0.0
      %1276 = vmatpush2.msra.mxu0 0.0
      %1277 = vmatprep.subr.mxu0 0.0
      %1278 = vmatpush2.msra.mxu0 0.0
      %1279 = vmatprep.subr.mxu0 0.0
      %1280 = vmatpush2.msra.mxu0 0.0
      %1281 = vmatprep.subr.mxu0 0.0
      %1282 = vmatpush2.msra.mxu0 0.0
      %1283 = vmatprep.subr.mxu0 0.0
      %1284 = vmatpush2.msra.mxu0 0.0
      %1285 = vmatprep.subr.mxu0 0.0
      %1286 = vmatpush2.msra.mxu0 0.0
      %1287 = vmatprep.subr.mxu0 0.0
      %1288 = vmatpush2.msra.mxu0 0.0
      %1289 = vmatprep.mubr.f32.mxu0 0.0
      %1290 = vmatmul.mubr.f32.gmra.mxu0 %v1199
      %v1291 = vpop.f32.mrf.mxu0
      %v1292 = vadd.f32 0.0, %v1291
      %v1293 = vpop.f32.mrf.mxu0
      %1294 = vmatprep.mubr.f32.mxu0 0.0
      %1295 = vmatmul.mubr.f32.gmra.mxu0 %v1202
      %v1296 = vpop.f32.mrf.mxu0
      %v1297 = vadd.f32 0.0, %v1296
      %v1298 = vpop.f32.mrf.mxu0
      %1299 = vmatprep.mubr.f32.mxu0 0.0
      %1300 = vmatmul.mubr.f32.gmra.mxu0 %v1205
      %v1301 = vpop.f32.mrf.mxu0
      %v1302 = vadd.f32 0.0, %v1301
      %v1303 = vpop.f32.mrf.mxu0
      %1304 = vmatprep.mubr.f32.mxu0 0.0
      %1305 = vmatmul.mubr.f32.gmra.mxu0 %v1208
      %v1306 = vpop.f32.mrf.mxu0
      %v1307 = vadd.f32 0.0, %v1306
      %v1308 = vpop.f32.mrf.mxu0
      %1309 = vmatprep.mubr.f32.mxu0 0.0
      %1310 = vmatmul.mubr.f32.gmra.mxu0 %v1211
      %v1311 = vpop.f32.mrf.mxu0
      %v1312 = vadd.f32 0.0, %v1311
      %v1313 = vpop.f32.mrf.mxu0
      %1314 = vmatprep.mubr.f32.mxu0 0.0
      %1315 = vmatmul.mubr.f32.gmra.mxu0 %v1214
      %v1316 = vpop.f32.mrf.mxu0
      %v1317 = vadd.f32 0.0, %v1316
      %v1318 = vpop.f32.mrf.mxu0
      %1319 = vmatprep.mubr.f32.mxu0 0.0
      %1320 = vmatmul.mubr.f32.gmra.mxu0 %v1217
      %v1321 = vpop.f32.mrf.mxu0
      %v1322 = vadd.f32 0.0, %v1321
      %v1323 = vpop.f32.mrf.mxu0
      %1324 = vmatprep.mubr.f32.mxu0 0.0
      %1325 = vmatmul.mubr.f32.gmra.mxu0 %v1220
      %v1326 = vpop.f32.mrf.mxu0
      %v1327 = vadd.f32 0.0, %v1326
      %v1328 = vpop.f32.mrf.mxu0
      %1329 = vdwg.mxu0
      %v1330 = vmul.f32 %v1039, %v1292
      %v1331 = vmul.f32 %v1041, %v1297
      %v1332 = vmul.f32 %v1043, %v1302
      %v1333 = vmul.f32 %v1045, %v1307
      %v1334 = vmul.f32 %v1047, %v1312
      %v1335 = vmul.f32 %v1049, %v1317
      %v1336 = vmul.f32 %v1051, %v1322
      %v1337 = vmul.f32 %v1053, %v1327
      %s1338 = smul.u32 %s64, 48
      %s1339 = scalar_lea.vmem %s3, %s1338
      %v1340 = vld [vmem:[%s1339] sm:$0xff]
      %v1341 = vld [vmem:[%s1339 + $0x8] sm:$0xff]
      %v1342 = vld [vmem:[%s1339 + $0x10] sm:$0xff]
      %v1343 = vld [vmem:[%s1339 + $0x18] sm:$0xff]
      %v1344 = vld [vmem:[%s1339 + $0x20] sm:$0xff]
      %v1345 = vld [vmem:[%s1339 + $0x28] sm:$0xff]
      %v1347 = vsel %vm1005, %v1330, 0
      %v1350 = vsel %vm1005, %v1331, 0
      %v1353 = vsel %vm1005, %v1332, 0
      %v1356 = vsel %vm1005, %v1333, 0
      %v1359 = vsel %vm1005, %v1334, 0
      %v1362 = vsel %vm1005, %v1335, 0
      %v1365 = vsel %vm1005, %v1336, 0
      %v1368 = vsel %vm1005, %v1337, 0
      %1370 = vmatprep.subr.mxu0 0.0
      %1371 = vmatpush1.msra.mxu0 0.0
      %1372 = vmatprep.subr.mxu0 0.0
      %1373 = vmatpush1.msra.mxu0 0.0
      %1374 = vmatprep.subr.mxu0 0.0
      %1375 = vmatpush1.msra.mxu0 0.0
      %1376 = vmatprep.subr.mxu0 0.0
      %1377 = vmatpush1.msra.mxu0 0.0
      %1378 = vmatprep.subr.mxu0 0.0
      %1379 = vmatpush1.msra.mxu0 0.0
      %1380 = vmatprep.subr.mxu0 0.0
      %1381 = vmatpush1.msra.mxu0 0.0
      %1382 = vmatprep.subr.mxu0 0.0
      %1383 = vmatpush1.msra.mxu0 0.0
      %1384 = vmatprep.subr.mxu0 0.0
      %1385 = vmatpush1.msra.mxu0 0.0
      %1386 = vmatprep.subr.mxu0 0.0
      %1387 = vmatpush1.msra.mxu0 0.0
      %1388 = vmatprep.subr.mxu0 0.0
      %1389 = vmatpush1.msra.mxu0 0.0
      %1390 = vmatprep.subr.mxu0 0.0
      %1391 = vmatpush1.msra.mxu0 %v1345
      %1392 = vmatprep.subr.mxu0 0.0
      %1393 = vmatpush1.msra.mxu0 %v1344
      %1394 = vmatprep.subr.mxu0 0.0
      %1395 = vmatpush1.msra.mxu0 %v1343
      %1396 = vmatprep.subr.mxu0 0.0
      %1397 = vmatpush1.msra.mxu0 %v1342
      %1398 = vmatprep.subr.mxu0 0.0
      %1399 = vmatpush1.msra.mxu0 %v1341
      %1400 = vmatprep.subr.mxu0 0.0
      %1401 = vmatpush1.msra.mxu0 %v1340
      %1402 = vmatprep.subr.mxu0 0.0
      %1403 = vmatpush2.msra.mxu0 0.0
      %1404 = vmatprep.subr.mxu0 0.0
      %1405 = vmatpush2.msra.mxu0 0.0
      %1406 = vmatprep.subr.mxu0 0.0
      %1407 = vmatpush2.msra.mxu0 0.0
      %1408 = vmatprep.subr.mxu0 0.0
      %1409 = vmatpush2.msra.mxu0 0.0
      %1410 = vmatprep.subr.mxu0 0.0
      %1411 = vmatpush2.msra.mxu0 0.0
      %1412 = vmatprep.subr.mxu0 0.0
      %1413 = vmatpush2.msra.mxu0 0.0
      %1414 = vmatprep.subr.mxu0 0.0
      %1415 = vmatpush2.msra.mxu0 0.0
      %1416 = vmatprep.subr.mxu0 0.0
      %1417 = vmatpush2.msra.mxu0 0.0
      %1418 = vmatprep.subr.mxu0 0.0
      %1419 = vmatpush2.msra.mxu0 0.0
      %1420 = vmatprep.subr.mxu0 0.0
      %1421 = vmatpush2.msra.mxu0 0.0
      %1422 = vmatprep.subr.mxu0 0.0
      %1423 = vmatpush2.msra.mxu0 0.0
      %1424 = vmatprep.subr.mxu0 0.0
      %1425 = vmatpush2.msra.mxu0 0.0
      %1426 = vmatprep.subr.mxu0 0.0
      %1427 = vmatpush2.msra.mxu0 0.0
      %1428 = vmatprep.subr.mxu0 0.0
      %1429 = vmatpush2.msra.mxu0 0.0
      %1430 = vmatprep.subr.mxu0 0.0
      %1431 = vmatpush2.msra.mxu0 0.0
      %1432 = vmatprep.subr.mxu0 0.0
      %1433 = vmatpush2.msra.mxu0 0.0
      %1434 = vmatprep.mubr.f32.mxu0 0.0
      %1435 = vmatmul.mubr.f32.gmra.mxu0 %v1347
      %v1436 = vpop.f32.mrf.mxu0
      %v1437 = vadd.f32 0.0, %v1436
      %v1438 = vpop.f32.mrf.mxu0
      %1439 = vmatprep.mubr.f32.mxu0 0.0
      %1440 = vmatmul.mubr.f32.gmra.mxu0 %v1350
      %v1441 = vpop.f32.mrf.mxu0
      %v1442 = vadd.f32 0.0, %v1441
      %v1443 = vpop.f32.mrf.mxu0
      %1444 = vmatprep.mubr.f32.mxu0 0.0
      %1445 = vmatmul.mubr.f32.gmra.mxu0 %v1353
      %v1446 = vpop.f32.mrf.mxu0
      %v1447 = vadd.f32 0.0, %v1446
      %v1448 = vpop.f32.mrf.mxu0
      %1449 = vmatprep.mubr.f32.mxu0 0.0
      %1450 = vmatmul.mubr.f32.gmra.mxu0 %v1356
      %v1451 = vpop.f32.mrf.mxu0
      %v1452 = vadd.f32 0.0, %v1451
      %v1453 = vpop.f32.mrf.mxu0
      %1454 = vmatprep.mubr.f32.mxu0 0.0
      %1455 = vmatmul.mubr.f32.gmra.mxu0 %v1359
      %v1456 = vpop.f32.mrf.mxu0
      %v1457 = vadd.f32 0.0, %v1456
      %v1458 = vpop.f32.mrf.mxu0
      %1459 = vmatprep.mubr.f32.mxu0 0.0
      %1460 = vmatmul.mubr.f32.gmra.mxu0 %v1362
      %v1461 = vpop.f32.mrf.mxu0
      %v1462 = vadd.f32 0.0, %v1461
      %v1463 = vpop.f32.mrf.mxu0
      %1464 = vmatprep.mubr.f32.mxu0 0.0
      %1465 = vmatmul.mubr.f32.gmra.mxu0 %v1365
      %v1466 = vpop.f32.mrf.mxu0
      %v1467 = vadd.f32 0.0, %v1466
      %v1468 = vpop.f32.mrf.mxu0
      %1469 = vmatprep.mubr.f32.mxu0 0.0
      %1470 = vmatmul.mubr.f32.gmra.mxu0 %v1368
      %v1471 = vpop.f32.mrf.mxu0
      %v1472 = vadd.f32 0.0, %v1471
      %v1473 = vpop.f32.mrf.mxu0
      %1474 = vdwg.mxu0
      %v1475 = vld [vmem:[%s9] sm:$0xff]
      %v1476 = vld [vmem:[%s9 + $0x8] sm:$0xff]
      %v1477 = vld [vmem:[%s9 + $0x10] sm:$0xff]
      %v1478 = vld [vmem:[%s9 + $0x18] sm:$0xff]
      %v1479 = vld [vmem:[%s9 + $0x20] sm:$0xff]
      %v1480 = vld [vmem:[%s9 + $0x28] sm:$0xff]
      %v1481 = vld [vmem:[%s9 + $0x30] sm:$0xff]
      %v1482 = vld [vmem:[%s9 + $0x38] sm:$0xff]
      %v1483 = vmul.f32 %v1437, %v1475
      %v1484 = vmul.f32 %v1442, %v1476
      %v1485 = vmul.f32 %v1447, %v1477
      %v1486 = vmul.f32 %v1452, %v1478
      %v1487 = vmul.f32 %v1457, %v1479
      %v1488 = vmul.f32 %v1462, %v1480
      %v1489 = vmul.f32 %v1467, %v1481
      %v1490 = vmul.f32 %v1472, %v1482
      %v1491 = vld [vmem:[%s10] sm:$0xff]
      %v1492 = vld [vmem:[%s10 + $0x8] sm:$0xff]
      %vm1493 = vcmask 523264
      %v1495 = vsel %vm1493, %v1491, 0
      %v1498 = vsel %vm1493, %v1492, 0
      %1500 = vmatprep.subr.mxu0 0.0
      %1501 = vmatpush1.msra.mxu0 0.0
      %1502 = vmatprep.subr.mxu0 0.0
      %1503 = vmatpush1.msra.mxu0 0.0
      %1504 = vmatprep.subr.mxu0 0.0
      %1505 = vmatpush1.msra.mxu0 0.0
      %1506 = vmatprep.subr.mxu0 0.0
      %1507 = vmatpush1.msra.mxu0 0.0
      %1508 = vmatprep.subr.mxu0 0.0
      %1509 = vmatpush1.msra.mxu0 0.0
      %1510 = vmatprep.subr.mxu0 0.0
      %1511 = vmatpush1.msra.mxu0 0.0
      %1512 = vmatprep.subr.mxu0 0.0
      %1513 = vmatpush1.msra.mxu0 0.0
      %1514 = vmatprep.subr.mxu0 0.0
      %1515 = vmatpush1.msra.mxu0 0.0
      %1516 = vmatprep.subr.mxu0 0.0
      %1517 = vmatpush1.msra.mxu0 %v1490
      %1518 = vmatprep.subr.mxu0 0.0
      %1519 = vmatpush1.msra.mxu0 %v1489
      %1520 = vmatprep.subr.mxu0 0.0
      %1521 = vmatpush1.msra.mxu0 %v1488
      %1522 = vmatprep.subr.mxu0 0.0
      %1523 = vmatpush1.msra.mxu0 %v1487
      %1524 = vmatprep.subr.mxu0 0.0
      %1525 = vmatpush1.msra.mxu0 %v1486
      %1526 = vmatprep.subr.mxu0 0.0
      %1527 = vmatpush1.msra.mxu0 %v1485
      %1528 = vmatprep.subr.mxu0 0.0
      %1529 = vmatpush1.msra.mxu0 %v1484
      %1530 = vmatprep.subr.mxu0 0.0
      %1531 = vmatpush1.msra.mxu0 %v1483
      %1532 = vmatprep.subr.mxu0 0.0
      %1533 = vmatpush2.msra.mxu0 0.0
      %1534 = vmatprep.subr.mxu0 0.0
      %1535 = vmatpush2.msra.mxu0 0.0
      %1536 = vmatprep.subr.mxu0 0.0
      %1537 = vmatpush2.msra.mxu0 0.0
      %1538 = vmatprep.subr.mxu0 0.0
      %1539 = vmatpush2.msra.mxu0 0.0
      %1540 = vmatprep.subr.mxu0 0.0
      %1541 = vmatpush2.msra.mxu0 0.0
      %1542 = vmatprep.subr.mxu0 0.0
      %1543 = vmatpush2.msra.mxu0 0.0
      %1544 = vmatprep.subr.mxu0 0.0
      %1545 = vmatpush2.msra.mxu0 0.0
      %1546 = vmatprep.subr.mxu0 0.0
      %1547 = vmatpush2.msra.mxu0 0.0
      %1548 = vmatprep.subr.mxu0 0.0
      %1549 = vmatpush2.msra.mxu0 0.0
      %1550 = vmatprep.subr.mxu0 0.0
      %1551 = vmatpush2.msra.mxu0 0.0
      %1552 = vmatprep.subr.mxu0 0.0
      %1553 = vmatpush2.msra.mxu0 0.0
      %1554 = vmatprep.subr.mxu0 0.0
      %1555 = vmatpush2.msra.mxu0 0.0
      %1556 = vmatprep.subr.mxu0 0.0
      %1557 = vmatpush2.msra.mxu0 0.0
      %1558 = vmatprep.subr.mxu0 0.0
      %1559 = vmatpush2.msra.mxu0 0.0
      %1560 = vmatprep.subr.mxu0 0.0
      %1561 = vmatpush2.msra.mxu0 0.0
      %1562 = vmatprep.subr.mxu0 0.0
      %1563 = vmatpush2.msra.mxu0 0.0
      %1564 = vmatprep.mubr.f32.mxu0 0.0
      %1565 = vmatmul.mubr.f32.gmra.mxu0 %v1495
      %v1566 = vpop.f32.mrf.mxu0
      %v1567 = vadd.f32 0.0, %v1566
      %v1568 = vpop.f32.mrf.mxu0
      %1569 = vmatprep.mubr.f32.mxu0 0.0
      %1570 = vmatmul.mubr.f32.gmra.mxu0 %v1498
      %v1571 = vpop.f32.mrf.mxu0
      %v1572 = vadd.f32 0.0, %v1571
      %v1573 = vpop.f32.mrf.mxu0
      %1574 = vdwg.mxu0
      %v1575 = vld [vmem:[%s17] sm:$0xff]
      %v1576 = vld [vmem:[%s17 + $0x8] sm:$0xff]
      %v1577 = vld [vmem:[%s17 + $0x10] sm:$0xff]
      %v1578 = vld [vmem:[%s17 + $0x18] sm:$0xff]
      %v1579 = vld [vmem:[%s18] sm:$0x1]
      %v1581 = vlaneseq
      %v1582 = vshrl.u32 %v1581, 7
      %v1583 = vsub.s32 0, %v1582
      %v1584 = vrot.slane %v1579, %v1583
      %v1587 = vsel %vm875, %v1567, 0
      %v1590 = vsel %vm875, %v1572, 0
      %1592 = vmatprep.subr.mxu0 0.0
      %1593 = vmatpush1.msra.mxu0 0.0
      %1594 = vmatprep.subr.mxu0 0.0
      %1595 = vmatpush1.msra.mxu0 0.0
      %1596 = vmatprep.subr.mxu0 0.0
      %1597 = vmatpush1.msra.mxu0 0.0
      %1598 = vmatprep.subr.mxu0 0.0
      %1599 = vmatpush1.msra.mxu0 0.0
      %1600 = vmatprep.subr.mxu0 0.0
      %1601 = vmatpush1.msra.mxu0 0.0
      %1602 = vmatprep.subr.mxu0 0.0
      %1603 = vmatpush1.msra.mxu0 0.0
      %1604 = vmatprep.subr.mxu0 0.0
      %1605 = vmatpush1.msra.mxu0 0.0
      %1606 = vmatprep.subr.mxu0 0.0
      %1607 = vmatpush1.msra.mxu0 0.0
      %1608 = vmatprep.subr.mxu0 0.0
      %1609 = vmatpush1.msra.mxu0 0.0
      %1610 = vmatprep.subr.mxu0 0.0
      %1611 = vmatpush1.msra.mxu0 0.0
      %1612 = vmatprep.subr.mxu0 0.0
      %1613 = vmatpush1.msra.mxu0 0.0
      %1614 = vmatprep.subr.mxu0 0.0
      %1615 = vmatpush1.msra.mxu0 0.0
      %1616 = vmatprep.subr.mxu0 0.0
      %1617 = vmatpush1.msra.mxu0 %v1578
      %1618 = vmatprep.subr.mxu0 0.0
      %1619 = vmatpush1.msra.mxu0 %v1577
      %1620 = vmatprep.subr.mxu0 0.0
      %1621 = vmatpush1.msra.mxu0 %v1576
      %1622 = vmatprep.subr.mxu0 0.0
      %1623 = vmatpush1.msra.mxu0 %v1575
      %1624 = vmatprep.subr.mxu0 0.0
      %1625 = vmatpush2.msra.mxu0 0.0
      %1626 = vmatprep.subr.mxu0 0.0
      %1627 = vmatpush2.msra.mxu0 0.0
      %1628 = vmatprep.subr.mxu0 0.0
      %1629 = vmatpush2.msra.mxu0 0.0
      %1630 = vmatprep.subr.mxu0 0.0
      %1631 = vmatpush2.msra.mxu0 0.0
      %1632 = vmatprep.subr.mxu0 0.0
      %1633 = vmatpush2.msra.mxu0 0.0
      %1634 = vmatprep.subr.mxu0 0.0
      %1635 = vmatpush2.msra.mxu0 0.0
      %1636 = vmatprep.subr.mxu0 0.0
      %1637 = vmatpush2.msra.mxu0 0.0
      %1638 = vmatprep.subr.mxu0 0.0
      %1639 = vmatpush2.msra.mxu0 0.0
      %1640 = vmatprep.subr.mxu0 0.0
      %1641 = vmatpush2.msra.mxu0 0.0
      %1642 = vmatprep.subr.mxu0 0.0
      %1643 = vmatpush2.msra.mxu0 0.0
      %1644 = vmatprep.subr.mxu0 0.0
      %1645 = vmatpush2.msra.mxu0 0.0
      %1646 = vmatprep.subr.mxu0 0.0
      %1647 = vmatpush2.msra.mxu0 0.0
      %1648 = vmatprep.subr.mxu0 0.0
      %1649 = vmatpush2.msra.mxu0 0.0
      %1650 = vmatprep.subr.mxu0 0.0
      %1651 = vmatpush2.msra.mxu0 0.0
      %1652 = vmatprep.subr.mxu0 0.0
      %1653 = vmatpush2.msra.mxu0 0.0
      %1654 = vmatprep.subr.mxu0 0.0
      %1655 = vmatpush2.msra.mxu0 0.0
      %1656 = vmatprep.mubr.f32.mxu0 0.0
      %1657 = vmatmul.mubr.f32.gmra.mxu0 %v1587
      %v1658 = vpop.f32.mrf.mxu0
      %v1659 = vadd.f32 %v1584, %v1658
      %v1660 = vpop.f32.mrf.mxu0
      %1661 = vmatprep.mubr.f32.mxu0 0.0
      %1662 = vmatmul.mubr.f32.gmra.mxu0 %v1590
      %v1663 = vpop.f32.mrf.mxu0
      %v1664 = vadd.f32 %v1584, %v1663
      %v1665 = vpop.f32.mrf.mxu0
      %1666 = vdwg.mxu0
      %s1667 = smul.u32 %s64, 16
      %s1668 = scalar_lea.vmem [#allocation2], %s1667
      %1669 = vst.msk [vmem:[%s1668] sm:$0xff] %vm875, %v1659
      %1670 = vst.msk [vmem:[%s1668 + $0x8] sm:$0xff] %vm875, %v1664
    $region82: #{tpu_custom_call.1} parent=1 // loop_footer
      %s68 = sadd.s32 1, %s64
    $region83: #{tpu_custom_call.1} parent=1 // loop_footer_branch
      %63 = sbr.rel target = $region79
    $region84: #{tpu_custom_call.1} parent=1 // loop_exit
      _
    // Predicated region
    $region85: #{tpu_custom_call.1} parent=1 // pred_check
      _
    $region86: #{tpu_custom_call.1} parent=1 // pred_check_branch
      %1672 = sbr.rel (0) target = $region88
    $region87: #{tpu_custom_call.1} parent=1 // pred_region
      %s1674 = ssub.s32 512, 512
      %1675 = vsyncadd [#allocation3], %s1674
      %s1676 = sshll.u32 [#allocation2], 4
      %s1677 = int_to_ptr.vmem [resolvable:$true] %s1676
      %1682 = dma.vmem_to_hbm [thread:$0]  %s1677, 512, %s19, [#allocation3], 128, 128, 8
    $region88: #{tpu_custom_call.1} parent=1 // pred_fallthru
      _
    // Predicated region
    $region89: #{tpu_custom_call.1} parent=1 // pred_check
      _
    $region90: #{tpu_custom_call.1} parent=1 // pred_check_branch
      %1684 = sbr.rel (0) target = $region92
    $region91: #{tpu_custom_call.1} parent=1 // pred_region
      %1685 = dma.done [#allocation3], 512
    $region92: #{tpu_custom_call.1} parent=1 // pred_fallthru
      _
    %1686 = vsyncpa [#allocation3], 1

</llo_original>
